<compile_context>
chip_gen: v6e
topology: v6e:2x2x1
jax: 0.10.0
libtpu: 0.0.40
codegen_flags: <defaults>
</compile_context>

<pallas_src>
import math

import jax
import jax.numpy as jnp
from jax.experimental import pallas as pl
from jax.experimental.pallas import tpu as pltpu


def _round_up(x, m):
    return ((x + m - 1) // m) * m


def critic_v_kernel(s_ref, w1_ref, w2_ref, b2_ref, w3_ref, b3_ref, out_ref, x_ref):
    d = s_ref.shape[1]
    tile_b = s_ref.shape[0]

    # Build the augmented layer-1 input in a small VMEM scratch:
    #   x = [states.astype(bf16) | ones]   shape (tile_b, D+1)
    # The in-kernel bf16 cast replaces the wrapper-side cast (half the states
    # HBM traffic, one fewer XLA launch); the ones column lets b1 ride the
    # already-K-padded layer-1 matmul (b1 is the last row of w1_ref).
    x_ref[:, :d] = s_ref[...].astype(jnp.bfloat16)
    x_ref[:, d:d + 1] = jnp.ones((tile_b, 1), jnp.bfloat16)

    # Layer 1: bf16 MXU matmul, f32 accumulation; bias already folded, ReLU on VPU.
    h = jnp.dot(x_ref[...], w1_ref[...], preferred_element_type=jnp.float32)
    h = jnp.maximum(h, 0.0)

    # Layer 2: bf16 MXU matmul, f32 accumulation, bias + ReLU.
    h = jnp.dot(h.astype(jnp.bfloat16), w2_ref[...], preferred_element_type=jnp.float32)
    h = jnp.maximum(h + b2_ref[...], 0.0)

    # Output layer: (tile_b, H2) @ (H2, 1) with w3 pre-transposed in the
    # wrapper -> standard MXU matmul, no transpose of h is ever materialized.
    v = jnp.dot(h, w3_ref[...], preferred_element_type=jnp.float32)
    out_ref[...] = (v + b3_ref[0]).astype(out_ref.dtype)


def prepare_critic_v_params(params):
    """One-time param prep (do this at init / after each optimizer step, NOT per forward).

    Returns (w1_aug_bf16, w2_bf16, b2_f32, w3_col_f32, b3_scalar_f32).
    """
    w1, b1, w2, b2, w3, b3 = params
    w1_aug = jnp.concatenate([w1, b1.reshape(1, -1)], axis=0).astype(jnp.bfloat16)  # (D+1, H1)
    w2_b = w2.astype(jnp.bfloat16)                                                   # (H1, H2)
    b2_f = b2.astype(jnp.float32).reshape(1, -1)                                     # (1, H2)
    w3_t = w3.astype(jnp.float32).reshape(-1, 1)                                     # (H2, 1) column
    b3_s = b3.astype(jnp.float32).reshape(-1)                                        # (1,) SMEM scalar
    return w1_aug, w2_b, b2_f, w3_t, b3_s


def _choose_tile_b(batch, max_tile_b):
    # Multiple of 128; >= 2 grid steps when B > 128 so v7x's two TensorCores
    # both get work on the "parallel" axis; padding stays well under one tile.
    num_tiles = max(1, pl.cdiv(batch, max_tile_b))
    if batch > 128 and num_tiles < 2:
        num_tiles = 2
    tile_b = max(128, _round_up(pl.cdiv(batch, num_tiles), 128))
    num_tiles = pl.cdiv(batch, tile_b)
    return tile_b, num_tiles


def critic_v_forward(states, prepared_params, *, max_tile_b=512):
    """Fused CriticV forward. Returns shape (batch,) == values.squeeze(-1)."""
    w1a, w2, b2, w3t, b3 = prepared_params
    B, D = states.shape
    H1 = w1a.shape[1]
    H2 = w2.shape[1]
    assert w1a.shape[0] == D + 1, "w1 must be the b1-augmented (D+1, H1) matrix"

    tile_b, num_tiles = _choose_tile_b(B, max_tile_b)
    Bp = num_tiles * tile_b
    s = states
    if Bp != B:
        # Small tail pad (< tile_b rows); padded rows are dropped by the [:B] slice.
        s = jnp.pad(s, ((0, Bp - B), (0, 0)))

    out = pl.pallas_call(
        critic_v_kernel,
        out_shape=jax.ShapeDtypeStruct((Bp, 1), jnp.float32),
        grid_spec=pltpu.PrefetchScalarGridSpec(
            num_scalar_prefetch=0,
            grid=(num_tiles,),
            in_specs=[
                pl.BlockSpec((tile_b, D), lambda i: (i, 0)),        # states tile (f32, pipelined)
                pl.BlockSpec((D + 1, H1), lambda i: (0, 0)),        # W1 (+b1 row), bf16, VMEM-resident
                pl.BlockSpec((H1, H2), lambda i: (0, 0)),           # W2, bf16, VMEM-resident
                pl.BlockSpec((1, H2), lambda i: (0, 0)),            # b2 (f32)
                pl.BlockSpec((H2, 1), lambda i: (0, 0)),            # w3 column (f32, pre-transposed)
                pl.BlockSpec(memory_space=pltpu.MemorySpace.SMEM),  # b3 scalar
            ],
            out_specs=pl.BlockSpec((tile_b, 1), lambda i: (i, 0)),
            scratch_shapes=[pltpu.VMEM((tile_b, D + 1), jnp.bfloat16)],  # augmented bf16 input
        ),
        compiler_params=pltpu.CompilerParams(
            dimension_semantics=("parallel",)),
    )(s, w1a, w2, b2, w3t, b3)

    return out[:B, 0]


def init_critic_v_params(key, state_dim, layer_units=(256, 256)):
    """nn.Linear-default init: U(-1/sqrt(fan_in), 1/sqrt(fan_in)). PyTorch-layout params."""
    assert len(layer_units) == 2, "kernel is specialized to two hidden layers"
    h1, h2 = layer_units
    params = []
    for fan_in, fan_out in ((state_dim, h1), (h1, h2)):
        key, kw, kb = jax.random.split(key, 3)
        bound = 1.0 / math.sqrt(fan_in)
        w = jax.random.uniform(kw, (fan_in, fan_out), jnp.float32, -bound, bound)
        b = jax.random.uniform(kb, (1, fan_out), jnp.float32, -bound, bound)
        params.extend([w, b])
    key, kw, kb = jax.random.split(key, 3)
    bound = 1.0 / math.sqrt(h2)
    w3 = jax.random.uniform(kw, (1, h2), jnp.float32, -bound, bound)   # (out=1, in) row
    b3 = jax.random.uniform(kb, (1, 1), jnp.float32, -bound, bound)
    return tuple(params + [w3, b3])


def critic_v_reference_f32(states, params):
    """Pure-f32 JAX equivalent of the PyTorch forward."""
    w1, b1, w2, b2, w3, b3 = params
    h = jnp.maximum(states @ w1 + b1, 0.0)
    h = jnp.maximum(h @ w2 + b2, 0.0)
    return (h @ w3.reshape(-1, 1) + b3)[:, 0]


def critic_v_reference_matched(states, params):
    """Reference using the same bf16-in / f32-accumulate math as the kernel."""
    w1, b1, w2, b2, w3, b3 = params
    x = jnp.concatenate(
        [states.astype(jnp.bfloat16),
         jnp.ones((states.shape[0], 1), jnp.bfloat16)], axis=-1)
    w1a = jnp.concatenate([w1, b1.reshape(1, -1)], axis=0).astype(jnp.bfloat16)
    h = jnp.maximum(jnp.dot(x, w1a, preferred_element_type=jnp.float32), 0.0)
    h = jnp.maximum(
        jnp.dot(h.astype(jnp.bfloat16), w2.astype(jnp.bfloat16),
                preferred_element_type=jnp.float32) + b2, 0.0)
    # Explicit f32 multiply-reduce for an unambiguous final layer.
    return jnp.sum(h * w3.reshape(1, -1), axis=-1) + b3[0, 0]


if __name__ == "__main__":
    key = jax.random.PRNGKey(0)
    batch, state_dim = 500, 16          # non-multiple batch exercises padding; -> 2 tiles of 256
    layer_units = (256, 256)

    key, ks = jax.random.split(key)
    states = jax.random.normal(ks, (batch, state_dim), jnp.float32)
    params = init_critic_v_params(key, state_dim, layer_units)
    prepared = prepare_critic_v_params(params)   # one-time bf16 cast / b1 fold / w3 transpose

    fwd = jax.jit(critic_v_forward)
    values = jax.block_until_ready(fwd(states, prepared))
    assert values.shape == (batch,), values.shape

    ref_match = critic_v_reference_matched(states, params)
    ref_f32 = critic_v_reference_f32(states, params)
    # Tight vs the matched-precision reference; loose vs pure f32 (bf16 hidden layers).
    assert jnp.allclose(values, ref_match, atol=1e-2, rtol=1e-2), (
        float(jnp.max(jnp.abs(values - ref_match))))
    assert jnp.allclose(values, ref_f32, atol=5e-2, rtol=5e-2), (
        float(jnp.max(jnp.abs(values - ref_f32))))
    print("KERNEL_OK")
</pallas_src>

<mosaic_0001>
module attributes {stable_mosaic.version = 11 : i64} {
  func.func @critic_v_kernel(%arg0: i32, %arg1: memref<256x16xf32, #tpu.memory_space<vmem>>, %arg2: memref<17x256xbf16, #tpu.memory_space<vmem>>, %arg3: memref<256x256xbf16, #tpu.memory_space<vmem>>, %arg4: memref<1x256xf32, #tpu.memory_space<vmem>>, %arg5: memref<256x1xf32, #tpu.memory_space<vmem>>, %arg6: memref<1xf32, #tpu.memory_space<smem>>, %arg7: memref<256x1xf32, #tpu.memory_space<vmem>>, %arg8: memref<256x17xbf16, #tpu.memory_space<vmem>>) attributes {dimension_semantics = [#tpu.dimension_semantics<parallel>], iteration_bounds = array<i64: 2>, scalar_prefetch = 0 : i64, scratch_operands = 1 : i64, tpu.core_type = #tpu.core_type<tc>, window_params = [{transform_indices = @transform_0, window_bounds = array<i64: 256, 16>}, {pipeline_mode = #tpu.pipeline_mode<synchronous>, transform_indices = @transform_1, window_bounds = array<i64: 17, 256>}, {pipeline_mode = #tpu.pipeline_mode<synchronous>, transform_indices = @transform_2, window_bounds = array<i64: 256, 256>}, {pipeline_mode = #tpu.pipeline_mode<synchronous>, transform_indices = @transform_3, window_bounds = array<i64: 1, 256>}, {pipeline_mode = #tpu.pipeline_mode<synchronous>, transform_indices = @transform_4, window_bounds = array<i64: 256, 1>}, {transform_indices = @transform_5, window_bounds = array<i64: 1>}, {transform_indices = @transform_6, window_bounds = array<i64: 256, 1>}]} {
    %c0 = arith.constant 0 : index
    %c0_0 = arith.constant 0 : index
    %0 = vector.load %arg1[%c0, %c0_0] : memref<256x16xf32, #tpu.memory_space<vmem>>, vector<256x16xf32>
    %1 = arith.truncf %0 : vector<256x16xf32> to vector<256x16xbf16>
    %c0_1 = arith.constant 0 : index
    %c0_2 = arith.constant 0 : index
    %2 = vector.load %arg8[%c0_1, %c0_2] : memref<256x17xbf16, #tpu.memory_space<vmem>>, vector<256x16xbf16>
    tpu.vector_store %arg8[%c0_1, %c0_2], %1 {strides = array<i32>} : memref<256x17xbf16, #tpu.memory_space<vmem>>, vector<256x16xbf16>,
    %cst = arith.constant 1.000000e+00 : bf16
    %3 = vector.broadcast %cst : bf16 to vector<256x1xbf16>
    %c0_3 = arith.constant 0 : index
    %c16 = arith.constant 16 : index
    %4 = vector.load %arg8[%c0_3, %c16] : memref<256x17xbf16, #tpu.memory_space<vmem>>, vector<256x1xbf16>
    tpu.vector_store %arg8[%c0_3, %c16], %3 {strides = array<i32>} : memref<256x17xbf16, #tpu.memory_space<vmem>>, vector<256x1xbf16>,
    %c0_4 = arith.constant 0 : index
    %c0_5 = arith.constant 0 : index
    %5 = vector.load %arg8[%c0_4, %c0_5] : memref<256x17xbf16, #tpu.memory_space<vmem>>, vector<256x17xbf16>
    %c0_6 = arith.constant 0 : index
    %c0_7 = arith.constant 0 : index
    %6 = vector.load %arg2[%c0_6, %c0_7] : memref<17x256xbf16, #tpu.memory_space<vmem>>, vector<17x256xbf16>
    %cst_8 = arith.constant dense<0.000000e+00> : vector<256x256xf32>
    %7 = tpu.matmul %5, %6, %cst_8 {dimension_numbers = #tpu.dot_dimension_numbers<[1], [0], [0], [1], [0, 0, 1, 1], [], []>} : vector<256x17xbf16>, vector<17x256xbf16>, vector<256x256xf32> -> vector<256x256xf32>
    %cst_9 = arith.constant 0.000000e+00 : f32
    %8 = vector.broadcast %cst_9 : f32 to vector<256x256xf32>
    %9 = arith.maximumf %7, %8 : vector<256x256xf32>
    %10 = arith.truncf %9 : vector<256x256xf32> to vector<256x256xbf16>
    %c0_10 = arith.constant 0 : index
    %c0_11 = arith.constant 0 : index
    %11 = vector.load %arg3[%c0_10, %c0_11] : memref<256x256xbf16, #tpu.memory_space<vmem>>, vector<256x256xbf16>
    %cst_12 = arith.constant dense<0.000000e+00> : vector<256x256xf32>
    %12 = tpu.matmul %10, %11, %cst_12 {dimension_numbers = #tpu.dot_dimension_numbers<[1], [0], [0], [1], [0, 0, 1, 1], [], []>} : vector<256x256xbf16>, vector<256x256xbf16>, vector<256x256xf32> -> vector<256x256xf32>
    %c0_13 = arith.constant 0 : index
    %c0_14 = arith.constant 0 : index
    %13 = vector.load %arg4[%c0_13, %c0_14] : memref<1x256xf32, #tpu.memory_space<vmem>>, vector<1x256xf32>
    %14 = vector.broadcast %13 : vector<1x256xf32> to vector<256x256xf32>
    %15 = arith.addf %12, %14 : vector<256x256xf32>
    %cst_15 = arith.constant 0.000000e+00 : f32
    %16 = vector.broadcast %cst_15 : f32 to vector<256x256xf32>
    %17 = arith.maximumf %15, %16 : vector<256x256xf32>
    %c0_16 = arith.constant 0 : index
    %c0_17 = arith.constant 0 : index
    %18 = vector.load %arg5[%c0_16, %c0_17] : memref<256x1xf32, #tpu.memory_space<vmem>>, vector<256x1xf32>
    %cst_18 = arith.constant dense<0.000000e+00> : vector<256x1xf32>
    %19 = tpu.matmul %17, %18, %cst_18 {dimension_numbers = #tpu.dot_dimension_numbers<[1], [0], [0], [1], [0, 0, 1, 1], [], []>} : vector<256x256xf32>, vector<256x1xf32>, vector<256x1xf32> -> vector<256x1xf32>
    %c0_19 = arith.constant 0 : index
    %20 = memref.load %arg6[%c0_19] : memref<1xf32, #tpu.memory_space<smem>>
    %21 = vector.broadcast %20 : f32 to vector<256x1xf32>
    %22 = arith.addf %19, %21 : vector<256x1xf32>
    %c0_20 = arith.constant 0 : index
    %c0_21 = arith.constant 0 : index
    %23 = vector.load %arg7[%c0_20, %c0_21] : memref<256x1xf32, #tpu.memory_space<vmem>>, vector<256x1xf32>
    tpu.vector_store %arg7[%c0_20, %c0_21], %22 {strides = array<i32>} : memref<256x1xf32, #tpu.memory_space<vmem>>, vector<256x1xf32>,
    return
  }
  func.func @transform_0(%arg0: i32) -> (i32, i32) {
    %c0_i32 = arith.constant 0 : i32
    %c0_i32_0 = arith.constant 0 : i32
    return %arg0, %c0_i32 : i32, i32
  }
  func.func @transform_1(%arg0: i32) -> (i32, i32) {
    %c0_i32 = arith.constant 0 : i32
    %c0_i32_0 = arith.constant 0 : i32
    %c0_i32_1 = arith.constant 0 : i32
    return %c0_i32, %c0_i32_0 : i32, i32
  }
  func.func @transform_2(%arg0: i32) -> (i32, i32) {
    %c0_i32 = arith.constant 0 : i32
    %c0_i32_0 = arith.constant 0 : i32
    %c0_i32_1 = arith.constant 0 : i32
    return %c0_i32, %c0_i32_0 : i32, i32
  }
  func.func @transform_3(%arg0: i32) -> (i32, i32) {
    %c0_i32 = arith.constant 0 : i32
    %c0_i32_0 = arith.constant 0 : i32
    %c0_i32_1 = arith.constant 0 : i32
    return %c0_i32, %c0_i32_0 : i32, i32
  }
  func.func @transform_4(%arg0: i32) -> (i32, i32) {
    %c0_i32 = arith.constant 0 : i32
    %c0_i32_0 = arith.constant 0 : i32
    %c0_i32_1 = arith.constant 0 : i32
    return %c0_i32, %c0_i32_0 : i32, i32
  }
  func.func @transform_5(%arg0: i32) -> i32 {
    %c0_i32 = arith.constant 0 : i32
    %c0_i32_0 = arith.constant 0 : i32
    return %c0_i32 : i32
  }
  func.func @transform_6(%arg0: i32) -> (i32, i32) {
    %c0_i32 = arith.constant 0 : i32
    %c0_i32_0 = arith.constant 0 : i32
    return %arg0, %c0_i32 : i32, i32
  }
}

</mosaic_0001>

<llo_original>
// kernel: critic_v_forward.1
$region0: #{critic_v_forward.1}
  #allocation0 [shape = 'u32[]', space=smem, size = 0x4, offset = 0x4, fixed_abs, tag = 'smem constant byte address 0x4 - core index']
  #allocation1 [shape = 'u32[144,128]{1,0:T(1,128)}', space=vmem, size = 0x12000, scoped, tag = 'internal scratch']
  #allocation2 [shape = 'bf16[256,17]{1,0:T(8,128)(2,1)}', space=vmem, size = 0x10000, scoped, tag = 'scratch operand']
  #allocation3 [shape = 'f32[1]{0:T(128)S(6)}', space=smem, size = 0x200, scoped, tag = 'scoped memory for critic_v_forward.1']
  %s0 = inlined_call_operand.vmem [shape: f32[512,16], index: 0, kind: input, shape index: {}]
  %s1 = inlined_call_operand.vmem [shape: bf16[17,256], index: 1, kind: input, shape index: {}]
  %s2 = inlined_call_operand.vmem [shape: bf16[256,256], index: 2, kind: input, shape index: {}]
  %s3 = inlined_call_operand.vmem [shape: f32[1,256], index: 3, kind: input, shape index: {}]
  %s4 = inlined_call_operand.vmem [shape: f32[256,1], index: 4, kind: input, shape index: {}]
  %s5 = inlined_call_operand.<no memory space> [shape: f32[1], index: 5, kind: input, shape index: {}]
  %s6 = inlined_call_operand.vmem [shape: f32[512,1], index: 6, kind: output, shape index: {}]
  %s7 = sld [smem:[#allocation0]]
  $region57: #{critic_v_forward.1} parent=0
    _
  %s9 = ssub.s32 1, %s7
  %s10 = scalar_select 0, %s9, %s7
  %11 = sst [smem:[#allocation3]] %s5
  loop: start=0, step=1, limit=4
  $region2: #{critic_v_forward.1} parent=0 // loop_pre_header
    _
  $region3: #{critic_v_forward.1} parent=0 // loop_header
    %s13 = sphi 0, %s17
    %p14 = scmp.ge.s32.totalorder %s13, 4
    %s23 = sphi 0, %s25
    %s26 = sphi 0, %s23
    %s27 = sphi 0, %s26
    %s43 = sphi 0, %s27
    %s47 = sphi 0, %s47
    %s49 = sphi 0, %s47
    %s50 = sphi 0, %s49
    %s64 = sphi 0, %s50
    %s68 = sphi 0, %s68
    %s70 = sphi 0, %s68
    %s71 = sphi 0, %s70
    %s85 = sphi 0, %s71
    %s89 = sphi 0, %s89
    %s91 = sphi 0, %s89
    %s92 = sphi 0, %s91
    %s106 = sphi 0, %s92
    %s110 = sphi 0, %s110
    %s112 = sphi 0, %s110
    %s113 = sphi 0, %s112
    %s127 = sphi 0, %s113
    %s131 = sphi 0, %s131
    %s133 = sphi 0, %s131
    %s134 = sphi 0, %s133
    %s148 = sphi 0, %s134
    %s154 = sphi 0, %s156
    %s157 = sphi 0, %s154
    %s158 = sphi 0, %s157
    %s174 = sphi 0, %s158
  $region4: #{critic_v_forward.1} parent=0 // loop_header_branch
    %16 = sbr.rel (%p14) target = $region8
  $region5: #{critic_v_forward.1} parent=0 // loop_body
    %s18 = ssub.s32 %s13, 1
    %s19 = ssub.s32 %s13, 2
    %s20 = sadd.s32 %s13, 1
    %s21 = ssub.s32 %s13, %s20
    %p22 = scmp.eq.s32.totalorder %s21, 0
    %s24 = sadd.s32 %s23, 1
    %s25 = scalar_select %p22, %s23, %s24
    %p28 = pneg %p22
    %p29 = scmp.eq.s32.totalorder %s13, 1
    %p30 = por %p28, %p29
    %p31 = scmp.ne.s32.totalorder %s23, %s26
    %p32 = scmp.eq.s32.totalorder %s13, 0
    %p33 = por %p31, %p32
    %p34 = scmp.ne.s32.totalorder %s23, %s26
    %p35 = scmp.eq.s32.totalorder %s18, 1
    %p36 = por %p34, %p35
    %p37 = scmp.ne.s32.totalorder %s26, %s27
    %p38 = scmp.eq.s32.totalorder %s18, 0
    %p39 = por %p37, %p38
    %p40 = scmp.ne.s32.totalorder %s26, %s27
    %p41 = scmp.eq.s32.totalorder %s19, 1
    %p42 = por %p40, %p41
    %p44 = scmp.ne.s32.totalorder %s27, %s43
    %p45 = scmp.eq.s32.totalorder %s19, 0
    %p46 = por %p44, %p45
    %s48 = sadd.s32 %s47, 1
    %p51 = scmp.eq.s32.totalorder %s13, 1
    %p52 = scmp.ne.s32.totalorder %s47, %s49
    %p53 = scmp.eq.s32.totalorder %s13, 0
    %p54 = por %p52, %p53
    %p55 = scmp.ne.s32.totalorder %s47, %s49
    %p56 = scmp.eq.s32.totalorder %s18, 1
    %p57 = por %p55, %p56
    %p58 = scmp.ne.s32.totalorder %s49, %s50
    %p59 = scmp.eq.s32.totalorder %s18, 0
    %p60 = por %p58, %p59
    %p61 = scmp.ne.s32.totalorder %s49, %s50
    %p62 = scmp.eq.s32.totalorder %s19, 1
    %p63 = por %p61, %p62
    %p65 = scmp.ne.s32.totalorder %s50, %s64
    %p66 = scmp.eq.s32.totalorder %s19, 0
    %p67 = por %p65, %p66
    %s69 = sadd.s32 %s68, 1
    %p72 = scmp.eq.s32.totalorder %s13, 1
    %p73 = scmp.ne.s32.totalorder %s68, %s70
    %p74 = scmp.eq.s32.totalorder %s13, 0
    %p75 = por %p73, %p74
    %p76 = scmp.ne.s32.totalorder %s68, %s70
    %p77 = scmp.eq.s32.totalorder %s18, 1
    %p78 = por %p76, %p77
    %p79 = scmp.ne.s32.totalorder %s70, %s71
    %p80 = scmp.eq.s32.totalorder %s18, 0
    %p81 = por %p79, %p80
    %p82 = scmp.ne.s32.totalorder %s70, %s71
    %p83 = scmp.eq.s32.totalorder %s19, 1
    %p84 = por %p82, %p83
    %p86 = scmp.ne.s32.totalorder %s71, %s85
    %p87 = scmp.eq.s32.totalorder %s19, 0
    %p88 = por %p86, %p87
    %s90 = sadd.s32 %s89, 1
    %p93 = scmp.eq.s32.totalorder %s13, 1
    %p94 = scmp.ne.s32.totalorder %s89, %s91
    %p95 = scmp.eq.s32.totalorder %s13, 0
    %p96 = por %p94, %p95
    %p97 = scmp.ne.s32.totalorder %s89, %s91
    %p98 = scmp.eq.s32.totalorder %s18, 1
    %p99 = por %p97, %p98
    %p100 = scmp.ne.s32.totalorder %s91, %s92
    %p101 = scmp.eq.s32.totalorder %s18, 0
    %p102 = por %p100, %p101
    %p103 = scmp.ne.s32.totalorder %s91, %s92
    %p104 = scmp.eq.s32.totalorder %s19, 1
    %p105 = por %p103, %p104
    %p107 = scmp.ne.s32.totalorder %s92, %s106
    %p108 = scmp.eq.s32.totalorder %s19, 0
    %p109 = por %p107, %p108
    %s111 = sadd.s32 %s110, 1
    %p114 = scmp.eq.s32.totalorder %s13, 1
    %p115 = scmp.ne.s32.totalorder %s110, %s112
    %p116 = scmp.eq.s32.totalorder %s13, 0
    %p117 = por %p115, %p116
    %p118 = scmp.ne.s32.totalorder %s110, %s112
    %p119 = scmp.eq.s32.totalorder %s18, 1
    %p120 = por %p118, %p119
    %p121 = scmp.ne.s32.totalorder %s112, %s113
    %p122 = scmp.eq.s32.totalorder %s18, 0
    %p123 = por %p121, %p122
    %p124 = scmp.ne.s32.totalorder %s112, %s113
    %p125 = scmp.eq.s32.totalorder %s19, 1
    %p126 = por %p124, %p125
    %p128 = scmp.ne.s32.totalorder %s113, %s127
    %p129 = scmp.eq.s32.totalorder %s19, 0
    %p130 = por %p128, %p129
    %s132 = sadd.s32 %s131, 1
    %p135 = scmp.eq.s32.totalorder %s13, 1
    %p136 = scmp.ne.s32.totalorder %s131, %s133
    %p137 = scmp.eq.s32.totalorder %s13, 0
    %p138 = por %p136, %p137
    %p139 = scmp.ne.s32.totalorder %s131, %s133
    %p140 = scmp.eq.s32.totalorder %s18, 1
    %p141 = por %p139, %p140
    %p142 = scmp.ne.s32.totalorder %s133, %s134
    %p143 = scmp.eq.s32.totalorder %s18, 0
    %p144 = por %p142, %p143
    %p145 = scmp.ne.s32.totalorder %s133, %s134
    %p146 = scmp.eq.s32.totalorder %s19, 1
    %p147 = por %p145, %p146
    %p149 = scmp.ne.s32.totalorder %s134, %s148
    %p150 = scmp.eq.s32.totalorder %s19, 0
    %p151 = por %p149, %p150
    %s152 = ssub.s32 %s13, %s20
    %p153 = scmp.eq.s32.totalorder %s152, 0
    %s155 = sadd.s32 %s154, 1
    %s156 = scalar_select %p153, %s154, %s155
    %p159 = pneg %p153
    %p160 = scmp.eq.s32.totalorder %s13, 1
    %p161 = por %p159, %p160
    %p162 = scmp.ne.s32.totalorder %s154, %s157
    %p163 = scmp.eq.s32.totalorder %s13, 0
    %p164 = por %p162, %p163
    %p165 = scmp.ne.s32.totalorder %s154, %s157
    %p166 = scmp.eq.s32.totalorder %s18, 1
    %p167 = por %p165, %p166
    %p168 = scmp.ne.s32.totalorder %s157, %s158
    %p169 = scmp.eq.s32.totalorder %s18, 0
    %p170 = por %p168, %p169
    %p171 = scmp.ne.s32.totalorder %s157, %s158
    %p172 = scmp.eq.s32.totalorder %s19, 1
    %p173 = por %p171, %p172
    %p175 = scmp.ne.s32.totalorder %s158, %s174
    %p176 = scmp.eq.s32.totalorder %s19, 0
    %p177 = por %p175, %p176
    %p178 = scmp.le.s32.totalorder 1, %s13
    %p179 = scmp.lt.s32.totalorder %s13, 3
    %p180 = pnand %p178, %p179
    %p181 = pneg %p180
    // Predicated region
    $region9: #{critic_v_forward.1} parent=5 // pred_check
      _
    $region10: #{critic_v_forward.1} parent=5 // pred_check_branch
      %183 = sbr.rel (%p180) target = $region12
    $region11: #{critic_v_forward.1} parent=5 // pred_region
      %s184 = ssub.s32 %s13, 1
      // Predicated region
      $region13: #{critic_v_forward.1} parent=11 // pred_check
        %p185 = pneg %p60
      $region14: #{critic_v_forward.1} parent=11 // pred_check_branch
        %187 = sbr.rel (%p185) target = $region16
      $region15: #{critic_v_forward.1} parent=11 // pred_region
        _
      $region16: #{critic_v_forward.1} parent=11 // pred_fallthru
        _
      // Predicated region
      $region17: #{critic_v_forward.1} parent=11 // pred_check
        %p188 = pneg %p81
      $region18: #{critic_v_forward.1} parent=11 // pred_check_branch
        %190 = sbr.rel (%p188) target = $region20
      $region19: #{critic_v_forward.1} parent=11 // pred_region
        _
      $region20: #{critic_v_forward.1} parent=11 // pred_fallthru
        _
      // Predicated region
      $region21: #{critic_v_forward.1} parent=11 // pred_check
        %p191 = pneg %p102
      $region22: #{critic_v_forward.1} parent=11 // pred_check_branch
        %193 = sbr.rel (%p191) target = $region24
      $region23: #{critic_v_forward.1} parent=11 // pred_region
        _
      $region24: #{critic_v_forward.1} parent=11 // pred_fallthru
        _
      // Predicated region
      $region25: #{critic_v_forward.1} parent=11 // pred_check
        %p194 = pneg %p123
      $region26: #{critic_v_forward.1} parent=11 // pred_check_branch
        %196 = sbr.rel (%p194) target = $region28
      $region27: #{critic_v_forward.1} parent=11 // pred_region
        _
      $region28: #{critic_v_forward.1} parent=11 // pred_fallthru
        _
      // Predicated region
      $region29: #{critic_v_forward.1} parent=11 // pred_check
        %p197 = pneg %p144
      $region30: #{critic_v_forward.1} parent=11 // pred_check_branch
        %199 = sbr.rel (%p197) target = $region32
      $region31: #{critic_v_forward.1} parent=11 // pred_region
        _
      $region32: #{critic_v_forward.1} parent=11 // pred_fallthru
        _
    $region12: #{critic_v_forward.1} parent=5 // pred_fallthru
      _
    %p200 = scmp.lt.s32.totalorder %s13, 2
    // Predicated region
    $region33: #{critic_v_forward.1} parent=5 // pred_check
      %p201 = pneg %p200
    $region34: #{critic_v_forward.1} parent=5 // pred_check_branch
      %203 = sbr.rel (%p201) target = $region36
    $region35: #{critic_v_forward.1} parent=5 // pred_region
      // Predicated region
      $region37: #{critic_v_forward.1} parent=35 // pred_check
        %p204 = pneg %p33
      $region38: #{critic_v_forward.1} parent=35 // pred_check_branch
        %206 = sbr.rel (%p204) target = $region40
      $region39: #{critic_v_forward.1} parent=35 // pred_region
        %s207 = smul.u32 32, %s13
        %p208 = scmp.lt.s32.totalorder %s207, 63
        %s209 = scalar_select %p208, %s207, 63
        %s210 = smul.addr %s209, 8
        %s211 = scalar_lea.vmem %s0, %s210
        %s212 = smul.u32 32, %s13
      $region40: #{critic_v_forward.1} parent=35 // pred_fallthru
        _
    $region36: #{critic_v_forward.1} parent=5 // pred_fallthru
      _
    %p213 = scmp.le.s32.totalorder 1, %s13
    %p214 = scmp.lt.s32.totalorder %s13, 3
    %p215 = pnand %p213, %p214
    %p216 = pneg %p215
    // Predicated region
    $region41: #{critic_v_forward.1} parent=5 // pred_check
      _
    $region42: #{critic_v_forward.1} parent=5 // pred_check_branch
      %218 = sbr.rel (%p215) target = $region44
    $region43: #{critic_v_forward.1} parent=5 // pred_region
      %s219 = ssub.s32 %s13, 1
      %s220 = smul.u32 32, %s18
      %p221 = scmp.lt.s32.totalorder %s220, 63
      %s222 = scalar_select %p221, %s220, 63
      %s223 = smul.addr %s222, 8
      %s224 = scalar_lea.vmem %s0, %s223
      %p225 = pneg %p39
      %p226 = pneg %p36
      %p227 = pneg %p60
      %p228 = pneg %p57
      %p229 = pneg %p81
      %p230 = pneg %p78
      %p231 = pneg %p102
      %p232 = pneg %p99
      %p233 = pneg %p123
      %p234 = pneg %p120
      %p235 = pneg %p144
      %p236 = pneg %p141
      %p237 = pneg %p170
      %p238 = pneg %p167
      %s239 = smul.u32 32, %s18
      %p240 = scmp.lt.s32.totalorder %s239, 63
      %s241 = scalar_select %p240, %s239, 63
      %s242 = smul.addr %s241, 8
      %s243 = scalar_lea.vmem %s6, %s242
      %s244 = smul.u32 32, %s18
      %p245 = scmp.lt.s32.totalorder %s244, 63
      %s246 = scalar_select %p245, %s244, 63
      %s247 = smul.addr %s246, 8
      %s248 = scalar_lea.vmem %s0, %s247
      %s249 = smul.u32 32, %s18
      %s250 = smul.u32 32, %s18
      %p251 = scmp.lt.s32.totalorder %s250, 63
      %s252 = scalar_select %p251, %s250, 63
      %s253 = smul.addr %s252, 8
      %s254 = scalar_lea.vmem %s6, %s253
      %s255 = smul.u32 32, %s18
      %v258 = vld [vmem:[%s248] sm:$0xff]
      %v259 = vld [vmem:[%s248 + $0x8] sm:$0xff]
      %v260 = vld [vmem:[%s248 + $0x10] sm:$0xff]
      %v261 = vld [vmem:[%s248 + $0x18] sm:$0xff]
      %v262 = vld [vmem:[%s248 + $0x20] sm:$0xff]
      %v263 = vld [vmem:[%s248 + $0x28] sm:$0xff]
      %v264 = vld [vmem:[%s248 + $0x30] sm:$0xff]
      %v265 = vld [vmem:[%s248 + $0x38] sm:$0xff]
      %v266 = vld [vmem:[%s248 + $0x40] sm:$0xff]
      %v267 = vld [vmem:[%s248 + $0x48] sm:$0xff]
      %v268 = vld [vmem:[%s248 + $0x50] sm:$0xff]
      %v269 = vld [vmem:[%s248 + $0x58] sm:$0xff]
      %v270 = vld [vmem:[%s248 + $0x60] sm:$0xff]
      %v271 = vld [vmem:[%s248 + $0x68] sm:$0xff]
      %v272 = vld [vmem:[%s248 + $0x70] sm:$0xff]
      %v273 = vld [vmem:[%s248 + $0x78] sm:$0xff]
      %v274 = vld [vmem:[%s248 + $0x80] sm:$0xff]
      %v275 = vld [vmem:[%s248 + $0x88] sm:$0xff]
      %v276 = vld [vmem:[%s248 + $0x90] sm:$0xff]
      %v277 = vld [vmem:[%s248 + $0x98] sm:$0xff]
      %v278 = vld [vmem:[%s248 + $0xa0] sm:$0xff]
      %v279 = vld [vmem:[%s248 + $0xa8] sm:$0xff]
      %v280 = vld [vmem:[%s248 + $0xb0] sm:$0xff]
      %v281 = vld [vmem:[%s248 + $0xb8] sm:$0xff]
      %v282 = vld [vmem:[%s248 + $0xc0] sm:$0xff]
      %v283 = vld [vmem:[%s248 + $0xc8] sm:$0xff]
      %v284 = vld [vmem:[%s248 + $0xd0] sm:$0xff]
      %v285 = vld [vmem:[%s248 + $0xd8] sm:$0xff]
      %v286 = vld [vmem:[%s248 + $0xe0] sm:$0xff]
      %v287 = vld [vmem:[%s248 + $0xe8] sm:$0xff]
      %v288 = vld [vmem:[%s248 + $0xf0] sm:$0xff]
      %v289 = vld [vmem:[%s248 + $0xf8] sm:$0xff]
      %v290 = vpack.c.bf16 %v259, %v258
      %v291 = vpack.c.bf16 %v261, %v260
      %v292 = vpack.c.bf16 %v263, %v262
      %v293 = vpack.c.bf16 %v265, %v264
      %v294 = vpack.c.bf16 %v267, %v266
      %v295 = vpack.c.bf16 %v269, %v268
      %v296 = vpack.c.bf16 %v271, %v270
      %v297 = vpack.c.bf16 %v273, %v272
      %v298 = vpack.c.bf16 %v275, %v274
      %v299 = vpack.c.bf16 %v277, %v276
      %v300 = vpack.c.bf16 %v279, %v278
      %v301 = vpack.c.bf16 %v281, %v280
      %v302 = vpack.c.bf16 %v283, %v282
      %v303 = vpack.c.bf16 %v285, %v284
      %v304 = vpack.c.bf16 %v287, %v286
      %v305 = vpack.c.bf16 %v289, %v288
      %v322 = vunpack.c.l.b16 %v290
      %v323 = vunpack.c.h.b16 %v290
      %v324 = vunpack.c.l.b16 %v291
      %v325 = vunpack.c.h.b16 %v291
      %v326 = vunpack.c.l.b16 %v292
      %v327 = vunpack.c.h.b16 %v292
      %v328 = vunpack.c.l.b16 %v293
      %v329 = vunpack.c.h.b16 %v293
      %v330 = vunpack.c.l.b16 %v294
      %v331 = vunpack.c.h.b16 %v294
      %v332 = vunpack.c.l.b16 %v295
      %v333 = vunpack.c.h.b16 %v295
      %v334 = vunpack.c.l.b16 %v296
      %v335 = vunpack.c.h.b16 %v296
      %v336 = vunpack.c.l.b16 %v297
      %v337 = vunpack.c.h.b16 %v297
      %v338 = vunpack.c.l.b16 %v298
      %v339 = vunpack.c.h.b16 %v298
      %v340 = vunpack.c.l.b16 %v299
      %v341 = vunpack.c.h.b16 %v299
      %v342 = vunpack.c.l.b16 %v300
      %v343 = vunpack.c.h.b16 %v300
      %v344 = vunpack.c.l.b16 %v301
      %v345 = vunpack.c.h.b16 %v301
      %v346 = vunpack.c.l.b16 %v302
      %v347 = vunpack.c.h.b16 %v302
      %v348 = vunpack.c.l.b16 %v303
      %v349 = vunpack.c.h.b16 %v303
      %v350 = vunpack.c.l.b16 %v304
      %v351 = vunpack.c.h.b16 %v304
      %v352 = vunpack.c.l.b16 %v305
      %v353 = vunpack.c.h.b16 %v305
      %v354 = vpack.c.b16 %v322, %v322
      %v355 = vpack.c.b16 %v323, %v323
      %v356 = vpack.c.b16 %v324, %v324
      %v357 = vpack.c.b16 %v325, %v325
      %v358 = vpack.c.b16 %v326, %v326
      %v359 = vpack.c.b16 %v327, %v327
      %v360 = vpack.c.b16 %v328, %v328
      %v361 = vpack.c.b16 %v329, %v329
      %v362 = vpack.c.b16 %v330, %v330
      %v363 = vpack.c.b16 %v331, %v331
      %v364 = vpack.c.b16 %v332, %v332
      %v365 = vpack.c.b16 %v333, %v333
      %v366 = vpack.c.b16 %v334, %v334
      %v367 = vpack.c.b16 %v335, %v335
      %v368 = vpack.c.b16 %v336, %v336
      %v369 = vpack.c.b16 %v337, %v337
      %v370 = vpack.c.b16 %v338, %v338
      %v371 = vpack.c.b16 %v339, %v339
      %v372 = vpack.c.b16 %v340, %v340
      %v373 = vpack.c.b16 %v341, %v341
      %v374 = vpack.c.b16 %v342, %v342
      %v375 = vpack.c.b16 %v343, %v343
      %v376 = vpack.c.b16 %v344, %v344
      %v377 = vpack.c.b16 %v345, %v345
      %v378 = vpack.c.b16 %v346, %v346
      %v379 = vpack.c.b16 %v347, %v347
      %v380 = vpack.c.b16 %v348, %v348
      %v381 = vpack.c.b16 %v349, %v349
      %v382 = vpack.c.b16 %v350, %v350
      %v383 = vpack.c.b16 %v351, %v351
      %v384 = vpack.c.b16 %v352, %v352
      %v385 = vpack.c.b16 %v353, %v353
      %vm418 = vcmask 125952
      %419 = vst.msk [vmem:[#allocation2] sm:$0xf] %vm418, %v354
      %420 = vst.msk [vmem:[#allocation2 + $0x4] sm:$0xf] %vm418, %v355
      %421 = vst.msk [vmem:[#allocation2 + $0x8] sm:$0xf] %vm418, %v356
      %422 = vst.msk [vmem:[#allocation2 + $0xc] sm:$0xf] %vm418, %v357
      %423 = vst.msk [vmem:[#allocation2 + $0x10] sm:$0xf] %vm418, %v358
      %424 = vst.msk [vmem:[#allocation2 + $0x14] sm:$0xf] %vm418, %v359
      %425 = vst.msk [vmem:[#allocation2 + $0x18] sm:$0xf] %vm418, %v360
      %426 = vst.msk [vmem:[#allocation2 + $0x1c] sm:$0xf] %vm418, %v361
      %427 = vst.msk [vmem:[#allocation2 + $0x20] sm:$0xf] %vm418, %v362
      %428 = vst.msk [vmem:[#allocation2 + $0x24] sm:$0xf] %vm418, %v363
      %429 = vst.msk [vmem:[#allocation2 + $0x28] sm:$0xf] %vm418, %v364
      %430 = vst.msk [vmem:[#allocation2 + $0x2c] sm:$0xf] %vm418, %v365
      %431 = vst.msk [vmem:[#allocation2 + $0x30] sm:$0xf] %vm418, %v366
      %432 = vst.msk [vmem:[#allocation2 + $0x34] sm:$0xf] %vm418, %v367
      %433 = vst.msk [vmem:[#allocation2 + $0x38] sm:$0xf] %vm418, %v368
      %434 = vst.msk [vmem:[#allocation2 + $0x3c] sm:$0xf] %vm418, %v369
      %435 = vst.msk [vmem:[#allocation2 + $0x40] sm:$0xf] %vm418, %v370
      %436 = vst.msk [vmem:[#allocation2 + $0x44] sm:$0xf] %vm418, %v371
      %437 = vst.msk [vmem:[#allocation2 + $0x48] sm:$0xf] %vm418, %v372
      %438 = vst.msk [vmem:[#allocation2 + $0x4c] sm:$0xf] %vm418, %v373
      %439 = vst.msk [vmem:[#allocation2 + $0x50] sm:$0xf] %vm418, %v374
      %440 = vst.msk [vmem:[#allocation2 + $0x54] sm:$0xf] %vm418, %v375
      %441 = vst.msk [vmem:[#allocation2 + $0x58] sm:$0xf] %vm418, %v376
      %442 = vst.msk [vmem:[#allocation2 + $0x5c] sm:$0xf] %vm418, %v377
      %443 = vst.msk [vmem:[#allocation2 + $0x60] sm:$0xf] %vm418, %v378
      %444 = vst.msk [vmem:[#allocation2 + $0x64] sm:$0xf] %vm418, %v379
      %445 = vst.msk [vmem:[#allocation2 + $0x68] sm:$0xf] %vm418, %v380
      %446 = vst.msk [vmem:[#allocation2 + $0x6c] sm:$0xf] %vm418, %v381
      %447 = vst.msk [vmem:[#allocation2 + $0x70] sm:$0xf] %vm418, %v382
      %448 = vst.msk [vmem:[#allocation2 + $0x74] sm:$0xf] %vm418, %v383
      %449 = vst.msk [vmem:[#allocation2 + $0x78] sm:$0xf] %vm418, %v384
      %450 = vst.msk [vmem:[#allocation2 + $0x7c] sm:$0xf] %vm418, %v385
      %vm451 = vcmask 134272
      %452 = vst.msk [vmem:[#allocation2] sm:$0xf] %vm451, 1065369472
      %453 = vst.msk [vmem:[#allocation2 + $0x4] sm:$0xf] %vm451, 1065369472
      %454 = vst.msk [vmem:[#allocation2 + $0x8] sm:$0xf] %vm451, 1065369472
      %455 = vst.msk [vmem:[#allocation2 + $0xc] sm:$0xf] %vm451, 1065369472
      %456 = vst.msk [vmem:[#allocation2 + $0x10] sm:$0xf] %vm451, 1065369472
      %457 = vst.msk [vmem:[#allocation2 + $0x14] sm:$0xf] %vm451, 1065369472
      %458 = vst.msk [vmem:[#allocation2 + $0x18] sm:$0xf] %vm451, 1065369472
      %459 = vst.msk [vmem:[#allocation2 + $0x1c] sm:$0xf] %vm451, 1065369472
      %460 = vst.msk [vmem:[#allocation2 + $0x20] sm:$0xf] %vm451, 1065369472
      %461 = vst.msk [vmem:[#allocation2 + $0x24] sm:$0xf] %vm451, 1065369472
      %462 = vst.msk [vmem:[#allocation2 + $0x28] sm:$0xf] %vm451, 1065369472
      %463 = vst.msk [vmem:[#allocation2 + $0x2c] sm:$0xf] %vm451, 1065369472
      %464 = vst.msk [vmem:[#allocation2 + $0x30] sm:$0xf] %vm451, 1065369472
      %465 = vst.msk [vmem:[#allocation2 + $0x34] sm:$0xf] %vm451, 1065369472
      %466 = vst.msk [vmem:[#allocation2 + $0x38] sm:$0xf] %vm451, 1065369472
      %467 = vst.msk [vmem:[#allocation2 + $0x3c] sm:$0xf] %vm451, 1065369472
      %468 = vst.msk [vmem:[#allocation2 + $0x40] sm:$0xf] %vm451, 1065369472
      %469 = vst.msk [vmem:[#allocation2 + $0x44] sm:$0xf] %vm451, 1065369472
      %470 = vst.msk [vmem:[#allocation2 + $0x48] sm:$0xf] %vm451, 1065369472
      %471 = vst.msk [vmem:[#allocation2 + $0x4c] sm:$0xf] %vm451, 1065369472
      %472 = vst.msk [vmem:[#allocation2 + $0x50] sm:$0xf] %vm451, 1065369472
      %473 = vst.msk [vmem:[#allocation2 + $0x54] sm:$0xf] %vm451, 1065369472
      %474 = vst.msk [vmem:[#allocation2 + $0x58] sm:$0xf] %vm451, 1065369472
      %475 = vst.msk [vmem:[#allocation2 + $0x5c] sm:$0xf] %vm451, 1065369472
      %476 = vst.msk [vmem:[#allocation2 + $0x60] sm:$0xf] %vm451, 1065369472
      %477 = vst.msk [vmem:[#allocation2 + $0x64] sm:$0xf] %vm451, 1065369472
      %478 = vst.msk [vmem:[#allocation2 + $0x68] sm:$0xf] %vm451, 1065369472
      %479 = vst.msk [vmem:[#allocation2 + $0x6c] sm:$0xf] %vm451, 1065369472
      %480 = vst.msk [vmem:[#allocation2 + $0x70] sm:$0xf] %vm451, 1065369472
      %481 = vst.msk [vmem:[#allocation2 + $0x74] sm:$0xf] %vm451, 1065369472
      %482 = vst.msk [vmem:[#allocation2 + $0x78] sm:$0xf] %vm451, 1065369472
      %483 = vst.msk [vmem:[#allocation2 + $0x7c] sm:$0xf] %vm451, 1065369472
      %v484 = vld [vmem:[#allocation2] sm:$0xf]
      %v485 = vld [vmem:[#allocation2 + $0x4] sm:$0xf]
      %v486 = vld [vmem:[#allocation2 + $0x8] sm:$0xf]
      %v487 = vld [vmem:[#allocation2 + $0xc] sm:$0xf]
      %v488 = vld [vmem:[#allocation2 + $0x10] sm:$0xf]
      %v489 = vld [vmem:[#allocation2 + $0x14] sm:$0xf]
      %v490 = vld [vmem:[#allocation2 + $0x18] sm:$0xf]
      %v491 = vld [vmem:[#allocation2 + $0x1c] sm:$0xf]
      %v492 = vld [vmem:[#allocation2 + $0x20] sm:$0xf]
      %v493 = vld [vmem:[#allocation2 + $0x24] sm:$0xf]
      %v494 = vld [vmem:[#allocation2 + $0x28] sm:$0xf]
      %v495 = vld [vmem:[#allocation2 + $0x2c] sm:$0xf]
      %v496 = vld [vmem:[#allocation2 + $0x30] sm:$0xf]
      %v497 = vld [vmem:[#allocation2 + $0x34] sm:$0xf]
      %v498 = vld [vmem:[#allocation2 + $0x38] sm:$0xf]
      %v499 = vld [vmem:[#allocation2 + $0x3c] sm:$0xf]
      %v500 = vld [vmem:[#allocation2 + $0x40] sm:$0xf]
      %v501 = vld [vmem:[#allocation2 + $0x44] sm:$0xf]
      %v502 = vld [vmem:[#allocation2 + $0x48] sm:$0xf]
      %v503 = vld [vmem:[#allocation2 + $0x4c] sm:$0xf]
      %v504 = vld [vmem:[#allocation2 + $0x50] sm:$0xf]
      %v505 = vld [vmem:[#allocation2 + $0x54] sm:$0xf]
      %v506 = vld [vmem:[#allocation2 + $0x58] sm:$0xf]
      %v507 = vld [vmem:[#allocation2 + $0x5c] sm:$0xf]
      %v508 = vld [vmem:[#allocation2 + $0x60] sm:$0xf]
      %v509 = vld [vmem:[#allocation2 + $0x64] sm:$0xf]
      %v510 = vld [vmem:[#allocation2 + $0x68] sm:$0xf]
      %v511 = vld [vmem:[#allocation2 + $0x6c] sm:$0xf]
      %v512 = vld [vmem:[#allocation2 + $0x70] sm:$0xf]
      %v513 = vld [vmem:[#allocation2 + $0x74] sm:$0xf]
      %v514 = vld [vmem:[#allocation2 + $0x78] sm:$0xf]
      %v515 = vld [vmem:[#allocation2 + $0x7c] sm:$0xf]
      %v516 = vld [vmem:[%s1] sm:$0xff]
      %v517 = vld [vmem:[%s1 + $0x8] sm:$0xff]
      %v518 = vld [vmem:[%s1 + $0x10] sm:$0x11]
      %v551 = vunpack.c.l.b16 %v484
      %v552 = vunpack.c.l.b16 %v485
      %v553 = vunpack.c.l.b16 %v486
      %v554 = vunpack.c.l.b16 %v487
      %v555 = vunpack.c.l.b16 %v488
      %v556 = vunpack.c.l.b16 %v489
      %v557 = vunpack.c.l.b16 %v490
      %v558 = vunpack.c.l.b16 %v491
      %v559 = vunpack.c.l.b16 %v492
      %v560 = vunpack.c.l.b16 %v493
      %v561 = vunpack.c.l.b16 %v494
      %v562 = vunpack.c.l.b16 %v495
      %v563 = vunpack.c.l.b16 %v496
      %v564 = vunpack.c.l.b16 %v497
      %v565 = vunpack.c.l.b16 %v498
      %v566 = vunpack.c.l.b16 %v499
      %v567 = vunpack.c.l.b16 %v500
      %v568 = vunpack.c.l.b16 %v501
      %v569 = vunpack.c.l.b16 %v502
      %v570 = vunpack.c.l.b16 %v503
      %v571 = vunpack.c.l.b16 %v504
      %v572 = vunpack.c.l.b16 %v505
      %v573 = vunpack.c.l.b16 %v506
      %v574 = vunpack.c.l.b16 %v507
      %v575 = vunpack.c.l.b16 %v508
      %v576 = vunpack.c.l.b16 %v509
      %v577 = vunpack.c.l.b16 %v510
      %v578 = vunpack.c.l.b16 %v511
      %v579 = vunpack.c.l.b16 %v512
      %v580 = vunpack.c.l.b16 %v513
      %v581 = vunpack.c.l.b16 %v514
      %v582 = vunpack.c.l.b16 %v515
      %v583 = vpack.c.b16 %v552, %v551
      %v584 = vpack.c.b16 %v554, %v553
      %v585 = vpack.c.b16 %v556, %v555
      %v586 = vpack.c.b16 %v558, %v557
      %v587 = vpack.c.b16 %v560, %v559
      %v588 = vpack.c.b16 %v562, %v561
      %v589 = vpack.c.b16 %v564, %v563
      %v590 = vpack.c.b16 %v566, %v565
      %v591 = vpack.c.b16 %v568, %v567
      %v592 = vpack.c.b16 %v570, %v569
      %v593 = vpack.c.b16 %v572, %v571
      %v594 = vpack.c.b16 %v574, %v573
      %v595 = vpack.c.b16 %v576, %v575
      %v596 = vpack.c.b16 %v578, %v577
      %v597 = vpack.c.b16 %v580, %v579
      %v598 = vpack.c.b16 %v582, %v581
      %v602 = vunpack.c.l.b16 %v516
      %v603 = vunpack.c.h.b16 %v516
      %v604 = vunpack.c.l.b16 %v517
      %v605 = vunpack.c.h.b16 %v517
      %v606 = vunpack.c.l.b16 %v518
      %v607 = vunpack.c.h.b16 %v518
      %v608 = vpack.c.b16 %v604, %v602
      %v609 = vpack.c.b16 %v605, %v603
      %v610 = vpack.c.b16 %v606, %v606
      %v611 = vpack.c.b16 %v607, %v607
      %vm614 = vcmask 138240
      %v616 = vsel %vm614, %v583, 0
      %v619 = vsel %vm614, %v584, 0
      %v622 = vsel %vm614, %v585, 0
      %v625 = vsel %vm614, %v586, 0
      %v628 = vsel %vm614, %v587, 0
      %v631 = vsel %vm614, %v588, 0
      %v634 = vsel %vm614, %v589, 0
      %v637 = vsel %vm614, %v590, 0
      %v640 = vsel %vm614, %v591, 0
      %v643 = vsel %vm614, %v592, 0
      %v646 = vsel %vm614, %v593, 0
      %v649 = vsel %vm614, %v594, 0
      %v652 = vsel %vm614, %v595, 0
      %v655 = vsel %vm614, %v596, 0
      %v658 = vsel %vm614, %v597, 0
      %v661 = vsel %vm614, %v598, 0
      %vm663 = vcmask 1040384
      %v664 = vsel 0, 4294967295, 65535
      %v665 = vsel %vm663, %v664, 0
      %v667 = vand.u32 %v610, %v665
      %v670 = vand.u32 %v611, %v665
      %672 = vmatprep.subr.bf16.mxu0 0
      %673 = vmatpush1.bf16.msra.mxu0 0
      %674 = vmatprep.subr.bf16.mxu0 0
      %675 = vmatpush1.bf16.msra.mxu0 0
      %676 = vmatprep.subr.bf16.mxu0 0
      %677 = vmatpush1.bf16.msra.mxu0 0
      %678 = vmatprep.subr.bf16.mxu0 0
      %679 = vmatpush1.bf16.msra.mxu0 0
      %680 = vmatprep.subr.bf16.mxu0 0
      %681 = vmatpush1.bf16.msra.mxu0 0
      %682 = vmatprep.subr.bf16.mxu0 0
      %683 = vmatpush1.bf16.msra.mxu0 0
      %684 = vmatprep.subr.bf16.mxu0 %v670
      %685 = vmatpush1.bf16.msra.mxu0 %v667
      %686 = vmatprep.subr.bf16.mxu0 %v609
      %687 = vmatpush1.bf16.msra.mxu0 %v608
      %688 = vmatprep.subr.bf16.mxu0 0
      %689 = vmatpush2.bf16.msra.mxu0 0
      %690 = vmatprep.subr.bf16.mxu0 0
      %691 = vmatpush2.bf16.msra.mxu0 0
      %692 = vmatprep.subr.bf16.mxu0 0
      %693 = vmatpush2.bf16.msra.mxu0 0
      %694 = vmatprep.subr.bf16.mxu0 0
      %695 = vmatpush2.bf16.msra.mxu0 0
      %696 = vmatprep.subr.bf16.mxu0 0
      %697 = vmatpush2.bf16.msra.mxu0 0
      %698 = vmatprep.subr.bf16.mxu0 0
      %699 = vmatpush2.bf16.msra.mxu0 0
      %700 = vmatprep.subr.bf16.mxu0 0
      %701 = vmatpush2.bf16.msra.mxu0 0
      %702 = vmatprep.subr.bf16.mxu0 0
      %703 = vmatpush2.bf16.msra.mxu0 0
      %704 = vmatprep.mubr.bf16.mxu0 0
      %705 = vmatmul.mubr.bf16.gmra.mxu0 %v616
      %v706 = vpop.f32.mrf.mxu0
      %v707 = vadd.f32 0.0, %v706
      %v708 = vpop.f32.mrf.mxu0
      %v709 = vadd.f32 0.0, %v708
      %v710 = vpop.f32.mrf.mxu0
      %v711 = vadd.f32 0.0, %v710
      %v712 = vpop.f32.mrf.mxu0
      %v713 = vadd.f32 0.0, %v712
      %714 = vmatprep.mubr.bf16.mxu0 0
      %715 = vmatmul.mubr.bf16.gmra.mxu0 %v619
      %v716 = vpop.f32.mrf.mxu0
      %v717 = vadd.f32 0.0, %v716
      %v718 = vpop.f32.mrf.mxu0
      %v719 = vadd.f32 0.0, %v718
      %v720 = vpop.f32.mrf.mxu0
      %v721 = vadd.f32 0.0, %v720
      %v722 = vpop.f32.mrf.mxu0
      %v723 = vadd.f32 0.0, %v722
      %724 = vmatprep.mubr.bf16.mxu0 0
      %725 = vmatmul.mubr.bf16.gmra.mxu0 %v622
      %v726 = vpop.f32.mrf.mxu0
      %v727 = vadd.f32 0.0, %v726
      %v728 = vpop.f32.mrf.mxu0
      %v729 = vadd.f32 0.0, %v728
      %v730 = vpop.f32.mrf.mxu0
      %v731 = vadd.f32 0.0, %v730
      %v732 = vpop.f32.mrf.mxu0
      %v733 = vadd.f32 0.0, %v732
      %734 = vmatprep.mubr.bf16.mxu0 0
      %735 = vmatmul.mubr.bf16.gmra.mxu0 %v625
      %v736 = vpop.f32.mrf.mxu0
      %v737 = vadd.f32 0.0, %v736
      %v738 = vpop.f32.mrf.mxu0
      %v739 = vadd.f32 0.0, %v738
      %v740 = vpop.f32.mrf.mxu0
      %v741 = vadd.f32 0.0, %v740
      %v742 = vpop.f32.mrf.mxu0
      %v743 = vadd.f32 0.0, %v742
      %744 = vmatprep.mubr.bf16.mxu0 0
      %745 = vmatmul.mubr.bf16.gmra.mxu0 %v628
      %v746 = vpop.f32.mrf.mxu0
      %v747 = vadd.f32 0.0, %v746
      %v748 = vpop.f32.mrf.mxu0
      %v749 = vadd.f32 0.0, %v748
      %v750 = vpop.f32.mrf.mxu0
      %v751 = vadd.f32 0.0, %v750
      %v752 = vpop.f32.mrf.mxu0
      %v753 = vadd.f32 0.0, %v752
      %754 = vmatprep.mubr.bf16.mxu0 0
      %755 = vmatmul.mubr.bf16.gmra.mxu0 %v631
      %v756 = vpop.f32.mrf.mxu0
      %v757 = vadd.f32 0.0, %v756
      %v758 = vpop.f32.mrf.mxu0
      %v759 = vadd.f32 0.0, %v758
      %v760 = vpop.f32.mrf.mxu0
      %v761 = vadd.f32 0.0, %v760
      %v762 = vpop.f32.mrf.mxu0
      %v763 = vadd.f32 0.0, %v762
      %764 = vmatprep.mubr.bf16.mxu0 0
      %765 = vmatmul.mubr.bf16.gmra.mxu0 %v634
      %v766 = vpop.f32.mrf.mxu0
      %v767 = vadd.f32 0.0, %v766
      %v768 = vpop.f32.mrf.mxu0
      %v769 = vadd.f32 0.0, %v768
      %v770 = vpop.f32.mrf.mxu0
      %v771 = vadd.f32 0.0, %v770
      %v772 = vpop.f32.mrf.mxu0
      %v773 = vadd.f32 0.0, %v772
      %774 = vmatprep.mubr.bf16.mxu0 0
      %775 = vmatmul.mubr.bf16.gmra.mxu0 %v637
      %v776 = vpop.f32.mrf.mxu0
      %v777 = vadd.f32 0.0, %v776
      %v778 = vpop.f32.mrf.mxu0
      %v779 = vadd.f32 0.0, %v778
      %v780 = vpop.f32.mrf.mxu0
      %v781 = vadd.f32 0.0, %v780
      %v782 = vpop.f32.mrf.mxu0
      %v783 = vadd.f32 0.0, %v782
      %784 = vmatprep.mubr.bf16.mxu0 0
      %785 = vmatmul.mubr.bf16.gmra.mxu0 %v640
      %v786 = vpop.f32.mrf.mxu0
      %v787 = vadd.f32 0.0, %v786
      %v788 = vpop.f32.mrf.mxu0
      %v789 = vadd.f32 0.0, %v788
      %v790 = vpop.f32.mrf.mxu0
      %v791 = vadd.f32 0.0, %v790
      %v792 = vpop.f32.mrf.mxu0
      %v793 = vadd.f32 0.0, %v792
      %794 = vmatprep.mubr.bf16.mxu0 0
      %795 = vmatmul.mubr.bf16.gmra.mxu0 %v643
      %v796 = vpop.f32.mrf.mxu0
      %v797 = vadd.f32 0.0, %v796
      %v798 = vpop.f32.mrf.mxu0
      %v799 = vadd.f32 0.0, %v798
      %v800 = vpop.f32.mrf.mxu0
      %v801 = vadd.f32 0.0, %v800
      %v802 = vpop.f32.mrf.mxu0
      %v803 = vadd.f32 0.0, %v802
      %804 = vmatprep.mubr.bf16.mxu0 0
      %805 = vmatmul.mubr.bf16.gmra.mxu0 %v646
      %v806 = vpop.f32.mrf.mxu0
      %v807 = vadd.f32 0.0, %v806
      %v808 = vpop.f32.mrf.mxu0
      %v809 = vadd.f32 0.0, %v808
      %v810 = vpop.f32.mrf.mxu0
      %v811 = vadd.f32 0.0, %v810
      %v812 = vpop.f32.mrf.mxu0
      %v813 = vadd.f32 0.0, %v812
      %814 = vmatprep.mubr.bf16.mxu0 0
      %815 = vmatmul.mubr.bf16.gmra.mxu0 %v649
      %v816 = vpop.f32.mrf.mxu0
      %v817 = vadd.f32 0.0, %v816
      %v818 = vpop.f32.mrf.mxu0
      %v819 = vadd.f32 0.0, %v818
      %v820 = vpop.f32.mrf.mxu0
      %v821 = vadd.f32 0.0, %v820
      %v822 = vpop.f32.mrf.mxu0
      %v823 = vadd.f32 0.0, %v822
      %824 = vmatprep.mubr.bf16.mxu0 0
      %825 = vmatmul.mubr.bf16.gmra.mxu0 %v652
      %v826 = vpop.f32.mrf.mxu0
      %v827 = vadd.f32 0.0, %v826
      %v828 = vpop.f32.mrf.mxu0
      %v829 = vadd.f32 0.0, %v828
      %v830 = vpop.f32.mrf.mxu0
      %v831 = vadd.f32 0.0, %v830
      %v832 = vpop.f32.mrf.mxu0
      %v833 = vadd.f32 0.0, %v832
      %834 = vmatprep.mubr.bf16.mxu0 0
      %835 = vmatmul.mubr.bf16.gmra.mxu0 %v655
      %v836 = vpop.f32.mrf.mxu0
      %v837 = vadd.f32 0.0, %v836
      %v838 = vpop.f32.mrf.mxu0
      %v839 = vadd.f32 0.0, %v838
      %v840 = vpop.f32.mrf.mxu0
      %v841 = vadd.f32 0.0, %v840
      %v842 = vpop.f32.mrf.mxu0
      %v843 = vadd.f32 0.0, %v842
      %844 = vmatprep.mubr.bf16.mxu0 0
      %845 = vmatmul.mubr.bf16.gmra.mxu0 %v658
      %v846 = vpop.f32.mrf.mxu0
      %v847 = vadd.f32 0.0, %v846
      %v848 = vpop.f32.mrf.mxu0
      %v849 = vadd.f32 0.0, %v848
      %v850 = vpop.f32.mrf.mxu0
      %v851 = vadd.f32 0.0, %v850
      %v852 = vpop.f32.mrf.mxu0
      %v853 = vadd.f32 0.0, %v852
      %854 = vmatprep.mubr.bf16.mxu0 0
      %855 = vmatmul.mubr.bf16.gmra.mxu0 %v661
      %v856 = vpop.f32.mrf.mxu0
      %v857 = vadd.f32 0.0, %v856
      %v858 = vpop.f32.mrf.mxu0
      %v859 = vadd.f32 0.0, %v858
      %v860 = vpop.f32.mrf.mxu0
      %v861 = vadd.f32 0.0, %v860
      %v862 = vpop.f32.mrf.mxu0
      %v863 = vadd.f32 0.0, %v862
      %864 = vdwg.mxu0
      %v865 = vmax.f32 %v707, 0.0
      %v866 = vmax.f32 %v709, 0.0
      %v867 = vmax.f32 %v711, 0.0
      %v868 = vmax.f32 %v713, 0.0
      %v869 = vmax.f32 %v717, 0.0
      %v870 = vmax.f32 %v719, 0.0
      %v871 = vmax.f32 %v721, 0.0
      %v872 = vmax.f32 %v723, 0.0
      %v873 = vmax.f32 %v727, 0.0
      %v874 = vmax.f32 %v729, 0.0
      %v875 = vmax.f32 %v731, 0.0
      %v876 = vmax.f32 %v733, 0.0
      %v877 = vmax.f32 %v737, 0.0
      %v878 = vmax.f32 %v739, 0.0
      %v879 = vmax.f32 %v741, 0.0
      %v880 = vmax.f32 %v743, 0.0
      %v881 = vmax.f32 %v747, 0.0
      %v882 = vmax.f32 %v749, 0.0
      %v883 = vmax.f32 %v751, 0.0
      %v884 = vmax.f32 %v753, 0.0
      %v885 = vmax.f32 %v757, 0.0
      %v886 = vmax.f32 %v759, 0.0
      %v887 = vmax.f32 %v761, 0.0
      %v888 = vmax.f32 %v763, 0.0
      %v889 = vmax.f32 %v767, 0.0
      %v890 = vmax.f32 %v769, 0.0
      %v891 = vmax.f32 %v771, 0.0
      %v892 = vmax.f32 %v773, 0.0
      %v893 = vmax.f32 %v777, 0.0
      %v894 = vmax.f32 %v779, 0.0
      %v895 = vmax.f32 %v781, 0.0
      %v896 = vmax.f32 %v783, 0.0
      %v897 = vmax.f32 %v787, 0.0
      %v898 = vmax.f32 %v789, 0.0
      %v899 = vmax.f32 %v791, 0.0
      %v900 = vmax.f32 %v793, 0.0
      %v901 = vmax.f32 %v797, 0.0
      %v902 = vmax.f32 %v799, 0.0
      %v903 = vmax.f32 %v801, 0.0
      %v904 = vmax.f32 %v803, 0.0
      %v905 = vmax.f32 %v807, 0.0
      %v906 = vmax.f32 %v809, 0.0
      %v907 = vmax.f32 %v811, 0.0
      %v908 = vmax.f32 %v813, 0.0
      %v909 = vmax.f32 %v817, 0.0
      %v910 = vmax.f32 %v819, 0.0
      %v911 = vmax.f32 %v821, 0.0
      %v912 = vmax.f32 %v823, 0.0
      %v913 = vmax.f32 %v827, 0.0
      %v914 = vmax.f32 %v829, 0.0
      %v915 = vmax.f32 %v831, 0.0
      %v916 = vmax.f32 %v833, 0.0
      %v917 = vmax.f32 %v837, 0.0
      %v918 = vmax.f32 %v839, 0.0
      %v919 = vmax.f32 %v841, 0.0
      %v920 = vmax.f32 %v843, 0.0
      %v921 = vmax.f32 %v847, 0.0
      %v922 = vmax.f32 %v849, 0.0
      %v923 = vmax.f32 %v851, 0.0
      %v924 = vmax.f32 %v853, 0.0
      %v925 = vmax.f32 %v857, 0.0
      %v926 = vmax.f32 %v859, 0.0
      %v927 = vmax.f32 %v861, 0.0
      %v928 = vmax.f32 %v863, 0.0
      %v929 = vpack.c.bf16 %v867, %v865
      %v930 = vpack.c.bf16 %v868, %v866
      %v931 = vpack.c.bf16 %v871, %v869
      %v932 = vpack.c.bf16 %v872, %v870
      %v933 = vpack.c.bf16 %v875, %v873
      %v934 = vpack.c.bf16 %v876, %v874
      %v935 = vpack.c.bf16 %v879, %v877
      %v936 = vpack.c.bf16 %v880, %v878
      %v937 = vpack.c.bf16 %v883, %v881
      %v938 = vpack.c.bf16 %v884, %v882
      %v939 = vpack.c.bf16 %v887, %v885
      %v940 = vpack.c.bf16 %v888, %v886
      %v941 = vpack.c.bf16 %v891, %v889
      %v942 = vpack.c.bf16 %v892, %v890
      %v943 = vpack.c.bf16 %v895, %v893
      %v944 = vpack.c.bf16 %v896, %v894
      %v945 = vpack.c.bf16 %v899, %v897
      %v946 = vpack.c.bf16 %v900, %v898
      %v947 = vpack.c.bf16 %v903, %v901
      %v948 = vpack.c.bf16 %v904, %v902
      %v949 = vpack.c.bf16 %v907, %v905
      %v950 = vpack.c.bf16 %v908, %v906
      %v951 = vpack.c.bf16 %v911, %v909
      %v952 = vpack.c.bf16 %v912, %v910
      %v953 = vpack.c.bf16 %v915, %v913
      %v954 = vpack.c.bf16 %v916, %v914
      %v955 = vpack.c.bf16 %v919, %v917
      %v956 = vpack.c.bf16 %v920, %v918
      %v957 = vpack.c.bf16 %v923, %v921
      %v958 = vpack.c.bf16 %v924, %v922
      %v959 = vpack.c.bf16 %v927, %v925
      %v960 = vpack.c.bf16 %v928, %v926
      %v961 = vld [vmem:[%s2] sm:$0xff]
      %v962 = vld [vmem:[%s2 + $0x8] sm:$0xff]
      %v963 = vld [vmem:[%s2 + $0x10] sm:$0xff]
      %v964 = vld [vmem:[%s2 + $0x18] sm:$0xff]
      %v965 = vld [vmem:[%s2 + $0x20] sm:$0xff]
      %v966 = vld [vmem:[%s2 + $0x28] sm:$0xff]
      %v967 = vld [vmem:[%s2 + $0x30] sm:$0xff]
      %v968 = vld [vmem:[%s2 + $0x38] sm:$0xff]
      %v969 = vld [vmem:[%s2 + $0x40] sm:$0xff]
      %v970 = vld [vmem:[%s2 + $0x48] sm:$0xff]
      %v971 = vld [vmem:[%s2 + $0x50] sm:$0xff]
      %v972 = vld [vmem:[%s2 + $0x58] sm:$0xff]
      %v973 = vld [vmem:[%s2 + $0x60] sm:$0xff]
      %v974 = vld [vmem:[%s2 + $0x68] sm:$0xff]
      %v975 = vld [vmem:[%s2 + $0x70] sm:$0xff]
      %v976 = vld [vmem:[%s2 + $0x78] sm:$0xff]
      %v977 = vld [vmem:[%s2 + $0x80] sm:$0xff]
      %v978 = vld [vmem:[%s2 + $0x88] sm:$0xff]
      %v979 = vld [vmem:[%s2 + $0x90] sm:$0xff]
      %v980 = vld [vmem:[%s2 + $0x98] sm:$0xff]
      %v981 = vld [vmem:[%s2 + $0xa0] sm:$0xff]
      %v982 = vld [vmem:[%s2 + $0xa8] sm:$0xff]
      %v983 = vld [vmem:[%s2 + $0xb0] sm:$0xff]
      %v984 = vld [vmem:[%s2 + $0xb8] sm:$0xff]
      %v985 = vld [vmem:[%s2 + $0xc0] sm:$0xff]
      %v986 = vld [vmem:[%s2 + $0xc8] sm:$0xff]
      %v987 = vld [vmem:[%s2 + $0xd0] sm:$0xff]
      %v988 = vld [vmem:[%s2 + $0xd8] sm:$0xff]
      %v989 = vld [vmem:[%s2 + $0xe0] sm:$0xff]
      %v990 = vld [vmem:[%s2 + $0xe8] sm:$0xff]
      %v991 = vld [vmem:[%s2 + $0xf0] sm:$0xff]
      %v992 = vld [vmem:[%s2 + $0xf8] sm:$0xff]
      %v993 = vld [vmem:[%s3] sm:$0x3]
      %v995 = vlaneseq
      %v996 = vshrl.u32 %v995, 7
      %v997 = vsub.s32 0, %v996
      %v998 = vrot.slane %v993, %v997
      %v999 = vlaneseq
      %v1000 = vshrl.u32 %v999, 7
      %v1001 = vsub.s32 1, %v1000
      %v1002 = vrot.slane %v993, %v1001
      %v1037 = vunpack.c.l.b16 %v961
      %v1038 = vunpack.c.h.b16 %v961
      %v1039 = vunpack.c.l.b16 %v962
      %v1040 = vunpack.c.h.b16 %v962
      %v1041 = vunpack.c.l.b16 %v963
      %v1042 = vunpack.c.h.b16 %v963
      %v1043 = vunpack.c.l.b16 %v964
      %v1044 = vunpack.c.h.b16 %v964
      %v1045 = vunpack.c.l.b16 %v965
      %v1046 = vunpack.c.h.b16 %v965
      %v1047 = vunpack.c.l.b16 %v966
      %v1048 = vunpack.c.h.b16 %v966
      %v1049 = vunpack.c.l.b16 %v967
      %v1050 = vunpack.c.h.b16 %v967
      %v1051 = vunpack.c.l.b16 %v968
      %v1052 = vunpack.c.h.b16 %v968
      %v1053 = vunpack.c.l.b16 %v969
      %v1054 = vunpack.c.h.b16 %v969
      %v1055 = vunpack.c.l.b16 %v970
      %v1056 = vunpack.c.h.b16 %v970
      %v1057 = vunpack.c.l.b16 %v971
      %v1058 = vunpack.c.h.b16 %v971
      %v1059 = vunpack.c.l.b16 %v972
      %v1060 = vunpack.c.h.b16 %v972
      %v1061 = vunpack.c.l.b16 %v973
      %v1062 = vunpack.c.h.b16 %v973
      %v1063 = vunpack.c.l.b16 %v974
      %v1064 = vunpack.c.h.b16 %v974
      %v1065 = vunpack.c.l.b16 %v975
      %v1066 = vunpack.c.h.b16 %v975
      %v1067 = vunpack.c.l.b16 %v976
      %v1068 = vunpack.c.h.b16 %v976
      %v1069 = vunpack.c.l.b16 %v977
      %v1070 = vunpack.c.h.b16 %v977
      %v1071 = vunpack.c.l.b16 %v978
      %v1072 = vunpack.c.h.b16 %v978
      %v1073 = vunpack.c.l.b16 %v979
      %v1074 = vunpack.c.h.b16 %v979
      %v1075 = vunpack.c.l.b16 %v980
      %v1076 = vunpack.c.h.b16 %v980
      %v1077 = vunpack.c.l.b16 %v981
      %v1078 = vunpack.c.h.b16 %v981
      %v1079 = vunpack.c.l.b16 %v982
      %v1080 = vunpack.c.h.b16 %v982
      %v1081 = vunpack.c.l.b16 %v983
      %v1082 = vunpack.c.h.b16 %v983
      %v1083 = vunpack.c.l.b16 %v984
      %v1084 = vunpack.c.h.b16 %v984
      %v1085 = vunpack.c.l.b16 %v985
      %v1086 = vunpack.c.h.b16 %v985
      %v1087 = vunpack.c.l.b16 %v986
      %v1088 = vunpack.c.h.b16 %v986
      %v1089 = vunpack.c.l.b16 %v987
      %v1090 = vunpack.c.h.b16 %v987
      %v1091 = vunpack.c.l.b16 %v988
      %v1092 = vunpack.c.h.b16 %v988
      %v1093 = vunpack.c.l.b16 %v989
      %v1094 = vunpack.c.h.b16 %v989
      %v1095 = vunpack.c.l.b16 %v990
      %v1096 = vunpack.c.h.b16 %v990
      %v1097 = vunpack.c.l.b16 %v991
      %v1098 = vunpack.c.h.b16 %v991
      %v1099 = vunpack.c.l.b16 %v992
      %v1100 = vunpack.c.h.b16 %v992
      %v1101 = vpack.c.b16 %v1039, %v1037
      %v1102 = vpack.c.b16 %v1040, %v1038
      %v1103 = vpack.c.b16 %v1043, %v1041
      %v1104 = vpack.c.b16 %v1044, %v1042
      %v1105 = vpack.c.b16 %v1047, %v1045
      %v1106 = vpack.c.b16 %v1048, %v1046
      %v1107 = vpack.c.b16 %v1051, %v1049
      %v1108 = vpack.c.b16 %v1052, %v1050
      %v1109 = vpack.c.b16 %v1055, %v1053
      %v1110 = vpack.c.b16 %v1056, %v1054
      %v1111 = vpack.c.b16 %v1059, %v1057
      %v1112 = vpack.c.b16 %v1060, %v1058
      %v1113 = vpack.c.b16 %v1063, %v1061
      %v1114 = vpack.c.b16 %v1064, %v1062
      %v1115 = vpack.c.b16 %v1067, %v1065
      %v1116 = vpack.c.b16 %v1068, %v1066
      %v1117 = vpack.c.b16 %v1071, %v1069
      %v1118 = vpack.c.b16 %v1072, %v1070
      %v1119 = vpack.c.b16 %v1075, %v1073
      %v1120 = vpack.c.b16 %v1076, %v1074
      %v1121 = vpack.c.b16 %v1079, %v1077
      %v1122 = vpack.c.b16 %v1080, %v1078
      %v1123 = vpack.c.b16 %v1083, %v1081
      %v1124 = vpack.c.b16 %v1084, %v1082
      %v1125 = vpack.c.b16 %v1087, %v1085
      %v1126 = vpack.c.b16 %v1088, %v1086
      %v1127 = vpack.c.b16 %v1091, %v1089
      %v1128 = vpack.c.b16 %v1092, %v1090
      %v1129 = vpack.c.b16 %v1095, %v1093
      %v1130 = vpack.c.b16 %v1096, %v1094
      %v1131 = vpack.c.b16 %v1099, %v1097
      %v1132 = vpack.c.b16 %v1100, %v1098
      %1165 = vmatprep.subr.bf16.mxu0 %v1116
      %1166 = vmatpush1.bf16.msra.mxu0 %v1115
      %1167 = vmatprep.subr.bf16.mxu0 %v1114
      %1168 = vmatpush1.bf16.msra.mxu0 %v1113
      %1169 = vmatprep.subr.bf16.mxu0 %v1112
      %1170 = vmatpush1.bf16.msra.mxu0 %v1111
      %1171 = vmatprep.subr.bf16.mxu0 %v1110
      %1172 = vmatpush1.bf16.msra.mxu0 %v1109
      %1173 = vmatprep.subr.bf16.mxu0 %v1108
      %1174 = vmatpush1.bf16.msra.mxu0 %v1107
      %1175 = vmatprep.subr.bf16.mxu0 %v1106
      %1176 = vmatpush1.bf16.msra.mxu0 %v1105
      %1177 = vmatprep.subr.bf16.mxu0 %v1104
      %1178 = vmatpush1.bf16.msra.mxu0 %v1103
      %1179 = vmatprep.subr.bf16.mxu0 %v1102
      %1180 = vmatpush1.bf16.msra.mxu0 %v1101
      %1181 = vmatprep.subr.bf16.mxu0 %v1132
      %1182 = vmatpush2.bf16.msra.mxu0 %v1131
      %1183 = vmatprep.subr.bf16.mxu0 %v1130
      %1184 = vmatpush2.bf16.msra.mxu0 %v1129
      %1185 = vmatprep.subr.bf16.mxu0 %v1128
      %1186 = vmatpush2.bf16.msra.mxu0 %v1127
      %1187 = vmatprep.subr.bf16.mxu0 %v1126
      %1188 = vmatpush2.bf16.msra.mxu0 %v1125
      %1189 = vmatprep.subr.bf16.mxu0 %v1124
      %1190 = vmatpush2.bf16.msra.mxu0 %v1123
      %1191 = vmatprep.subr.bf16.mxu0 %v1122
      %1192 = vmatpush2.bf16.msra.mxu0 %v1121
      %1193 = vmatprep.subr.bf16.mxu0 %v1120
      %1194 = vmatpush2.bf16.msra.mxu0 %v1119
      %1195 = vmatprep.subr.bf16.mxu0 %v1118
      %1196 = vmatpush2.bf16.msra.mxu0 %v1117
      %1197 = vmatprep.mubr.bf16.mxu0 %v930
      %1198 = vmatmul.mubr.bf16.gmra.mxu0 %v929
      %v1199 = vpop.f32.mrf.mxu0
      %v1200 = vadd.f32 %v998, %v1199
      %v1201 = vpop.f32.mrf.mxu0
      %v1202 = vadd.f32 %v1002, %v1201
      %v1203 = vpop.f32.mrf.mxu0
      %v1204 = vadd.f32 %v998, %v1203
      %v1205 = vpop.f32.mrf.mxu0
      %v1206 = vadd.f32 %v1002, %v1205
      %1207 = vmatprep.mubr.bf16.mxu0 %v932
      %1208 = vmatmul.mubr.bf16.gmra.mxu0 %v931
      %v1209 = vpop.f32.mrf.mxu0
      %v1210 = vadd.f32 %v998, %v1209
      %v1211 = vpop.f32.mrf.mxu0
      %v1212 = vadd.f32 %v1002, %v1211
      %v1213 = vpop.f32.mrf.mxu0
      %v1214 = vadd.f32 %v998, %v1213
      %v1215 = vpop.f32.mrf.mxu0
      %v1216 = vadd.f32 %v1002, %v1215
      %1217 = vmatprep.mubr.bf16.mxu0 %v934
      %1218 = vmatmul.mubr.bf16.gmra.mxu0 %v933
      %v1219 = vpop.f32.mrf.mxu0
      %v1220 = vadd.f32 %v998, %v1219
      %v1221 = vpop.f32.mrf.mxu0
      %v1222 = vadd.f32 %v1002, %v1221
      %v1223 = vpop.f32.mrf.mxu0
      %v1224 = vadd.f32 %v998, %v1223
      %v1225 = vpop.f32.mrf.mxu0
      %v1226 = vadd.f32 %v1002, %v1225
      %1227 = vmatprep.mubr.bf16.mxu0 %v936
      %1228 = vmatmul.mubr.bf16.gmra.mxu0 %v935
      %v1229 = vpop.f32.mrf.mxu0
      %v1230 = vadd.f32 %v998, %v1229
      %v1231 = vpop.f32.mrf.mxu0
      %v1232 = vadd.f32 %v1002, %v1231
      %v1233 = vpop.f32.mrf.mxu0
      %v1234 = vadd.f32 %v998, %v1233
      %v1235 = vpop.f32.mrf.mxu0
      %v1236 = vadd.f32 %v1002, %v1235
      %1237 = vmatprep.mubr.bf16.mxu0 %v938
      %1238 = vmatmul.mubr.bf16.gmra.mxu0 %v937
      %v1239 = vpop.f32.mrf.mxu0
      %v1240 = vadd.f32 %v998, %v1239
      %v1241 = vpop.f32.mrf.mxu0
      %v1242 = vadd.f32 %v1002, %v1241
      %v1243 = vpop.f32.mrf.mxu0
      %v1244 = vadd.f32 %v998, %v1243
      %v1245 = vpop.f32.mrf.mxu0
      %v1246 = vadd.f32 %v1002, %v1245
      %1247 = vmatprep.mubr.bf16.mxu0 %v940
      %1248 = vmatmul.mubr.bf16.gmra.mxu0 %v939
      %v1249 = vpop.f32.mrf.mxu0
      %v1250 = vadd.f32 %v998, %v1249
      %v1251 = vpop.f32.mrf.mxu0
      %v1252 = vadd.f32 %v1002, %v1251
      %v1253 = vpop.f32.mrf.mxu0
      %v1254 = vadd.f32 %v998, %v1253
      %v1255 = vpop.f32.mrf.mxu0
      %v1256 = vadd.f32 %v1002, %v1255
      %1257 = vmatprep.mubr.bf16.mxu0 %v942
      %1258 = vmatmul.mubr.bf16.gmra.mxu0 %v941
      %v1259 = vpop.f32.mrf.mxu0
      %v1260 = vadd.f32 %v998, %v1259
      %v1261 = vpop.f32.mrf.mxu0
      %v1262 = vadd.f32 %v1002, %v1261
      %v1263 = vpop.f32.mrf.mxu0
      %v1264 = vadd.f32 %v998, %v1263
      %v1265 = vpop.f32.mrf.mxu0
      %v1266 = vadd.f32 %v1002, %v1265
      %1267 = vmatprep.mubr.bf16.mxu0 %v944
      %1268 = vmatmul.mubr.bf16.gmra.mxu0 %v943
      %v1269 = vpop.f32.mrf.mxu0
      %v1270 = vadd.f32 %v998, %v1269
      %v1271 = vpop.f32.mrf.mxu0
      %v1272 = vadd.f32 %v1002, %v1271
      %v1273 = vpop.f32.mrf.mxu0
      %v1274 = vadd.f32 %v998, %v1273
      %v1275 = vpop.f32.mrf.mxu0
      %v1276 = vadd.f32 %v1002, %v1275
      %1277 = vmatprep.mubr.bf16.mxu0 %v946
      %1278 = vmatmul.mubr.bf16.gmra.mxu0 %v945
      %v1279 = vpop.f32.mrf.mxu0
      %v1280 = vadd.f32 %v998, %v1279
      %v1281 = vpop.f32.mrf.mxu0
      %v1282 = vadd.f32 %v1002, %v1281
      %v1283 = vpop.f32.mrf.mxu0
      %v1284 = vadd.f32 %v998, %v1283
      %v1285 = vpop.f32.mrf.mxu0
      %v1286 = vadd.f32 %v1002, %v1285
      %1287 = vmatprep.mubr.bf16.mxu0 %v948
      %1288 = vmatmul.mubr.bf16.gmra.mxu0 %v947
      %v1289 = vpop.f32.mrf.mxu0
      %v1290 = vadd.f32 %v998, %v1289
      %v1291 = vpop.f32.mrf.mxu0
      %v1292 = vadd.f32 %v1002, %v1291
      %v1293 = vpop.f32.mrf.mxu0
      %v1294 = vadd.f32 %v998, %v1293
      %v1295 = vpop.f32.mrf.mxu0
      %v1296 = vadd.f32 %v1002, %v1295
      %1297 = vmatprep.mubr.bf16.mxu0 %v950
      %1298 = vmatmul.mubr.bf16.gmra.mxu0 %v949
      %v1299 = vpop.f32.mrf.mxu0
      %v1300 = vadd.f32 %v998, %v1299
      %v1301 = vpop.f32.mrf.mxu0
      %v1302 = vadd.f32 %v1002, %v1301
      %v1303 = vpop.f32.mrf.mxu0
      %v1304 = vadd.f32 %v998, %v1303
      %v1305 = vpop.f32.mrf.mxu0
      %v1306 = vadd.f32 %v1002, %v1305
      %1307 = vmatprep.mubr.bf16.mxu0 %v952
      %1308 = vmatmul.mubr.bf16.gmra.mxu0 %v951
      %v1309 = vpop.f32.mrf.mxu0
      %v1310 = vadd.f32 %v998, %v1309
      %v1311 = vpop.f32.mrf.mxu0
      %v1312 = vadd.f32 %v1002, %v1311
      %v1313 = vpop.f32.mrf.mxu0
      %v1314 = vadd.f32 %v998, %v1313
      %v1315 = vpop.f32.mrf.mxu0
      %v1316 = vadd.f32 %v1002, %v1315
      %1317 = vmatprep.mubr.bf16.mxu0 %v954
      %1318 = vmatmul.mubr.bf16.gmra.mxu0 %v953
      %v1319 = vpop.f32.mrf.mxu0
      %v1320 = vadd.f32 %v998, %v1319
      %v1321 = vpop.f32.mrf.mxu0
      %v1322 = vadd.f32 %v1002, %v1321
      %v1323 = vpop.f32.mrf.mxu0
      %v1324 = vadd.f32 %v998, %v1323
      %v1325 = vpop.f32.mrf.mxu0
      %v1326 = vadd.f32 %v1002, %v1325
      %1327 = vmatprep.mubr.bf16.mxu0 %v956
      %1328 = vmatmul.mubr.bf16.gmra.mxu0 %v955
      %v1329 = vpop.f32.mrf.mxu0
      %v1330 = vadd.f32 %v998, %v1329
      %v1331 = vpop.f32.mrf.mxu0
      %v1332 = vadd.f32 %v1002, %v1331
      %v1333 = vpop.f32.mrf.mxu0
      %v1334 = vadd.f32 %v998, %v1333
      %v1335 = vpop.f32.mrf.mxu0
      %v1336 = vadd.f32 %v1002, %v1335
      %1337 = vmatprep.mubr.bf16.mxu0 %v958
      %1338 = vmatmul.mubr.bf16.gmra.mxu0 %v957
      %v1339 = vpop.f32.mrf.mxu0
      %v1340 = vadd.f32 %v998, %v1339
      %v1341 = vpop.f32.mrf.mxu0
      %v1342 = vadd.f32 %v1002, %v1341
      %v1343 = vpop.f32.mrf.mxu0
      %v1344 = vadd.f32 %v998, %v1343
      %v1345 = vpop.f32.mrf.mxu0
      %v1346 = vadd.f32 %v1002, %v1345
      %1347 = vmatprep.mubr.bf16.mxu0 %v960
      %1348 = vmatmul.mubr.bf16.gmra.mxu0 %v959
      %v1349 = vpop.f32.mrf.mxu0
      %v1350 = vadd.f32 %v998, %v1349
      %v1351 = vpop.f32.mrf.mxu0
      %v1352 = vadd.f32 %v1002, %v1351
      %v1353 = vpop.f32.mrf.mxu0
      %v1354 = vadd.f32 %v998, %v1353
      %v1355 = vpop.f32.mrf.mxu0
      %v1356 = vadd.f32 %v1002, %v1355
      %1357 = vdwg.mxu0
      %v1358 = vmax.f32 %v1200, 0.0
      %v1359 = vmax.f32 %v1202, 0.0
      %v1360 = vmax.f32 %v1204, 0.0
      %v1361 = vmax.f32 %v1206, 0.0
      %v1362 = vmax.f32 %v1210, 0.0
      %v1363 = vmax.f32 %v1212, 0.0
      %v1364 = vmax.f32 %v1214, 0.0
      %v1365 = vmax.f32 %v1216, 0.0
      %v1366 = vmax.f32 %v1220, 0.0
      %v1367 = vmax.f32 %v1222, 0.0
      %v1368 = vmax.f32 %v1224, 0.0
      %v1369 = vmax.f32 %v1226, 0.0
      %v1370 = vmax.f32 %v1230, 0.0
      %v1371 = vmax.f32 %v1232, 0.0
      %v1372 = vmax.f32 %v1234, 0.0
      %v1373 = vmax.f32 %v1236, 0.0
      %v1374 = vmax.f32 %v1240, 0.0
      %v1375 = vmax.f32 %v1242, 0.0
      %v1376 = vmax.f32 %v1244, 0.0
      %v1377 = vmax.f32 %v1246, 0.0
      %v1378 = vmax.f32 %v1250, 0.0
      %v1379 = vmax.f32 %v1252, 0.0
      %v1380 = vmax.f32 %v1254, 0.0
      %v1381 = vmax.f32 %v1256, 0.0
      %v1382 = vmax.f32 %v1260, 0.0
      %v1383 = vmax.f32 %v1262, 0.0
      %v1384 = vmax.f32 %v1264, 0.0
      %v1385 = vmax.f32 %v1266, 0.0
      %v1386 = vmax.f32 %v1270, 0.0
      %v1387 = vmax.f32 %v1272, 0.0
      %v1388 = vmax.f32 %v1274, 0.0
      %v1389 = vmax.f32 %v1276, 0.0
      %v1390 = vmax.f32 %v1280, 0.0
      %v1391 = vmax.f32 %v1282, 0.0
      %v1392 = vmax.f32 %v1284, 0.0
      %v1393 = vmax.f32 %v1286, 0.0
      %v1394 = vmax.f32 %v1290, 0.0
      %v1395 = vmax.f32 %v1292, 0.0
      %v1396 = vmax.f32 %v1294, 0.0
      %v1397 = vmax.f32 %v1296, 0.0
      %v1398 = vmax.f32 %v1300, 0.0
      %v1399 = vmax.f32 %v1302, 0.0
      %v1400 = vmax.f32 %v1304, 0.0
      %v1401 = vmax.f32 %v1306, 0.0
      %v1402 = vmax.f32 %v1310, 0.0
      %v1403 = vmax.f32 %v1312, 0.0
      %v1404 = vmax.f32 %v1314, 0.0
      %v1405 = vmax.f32 %v1316, 0.0
      %v1406 = vmax.f32 %v1320, 0.0
      %v1407 = vmax.f32 %v1322, 0.0
      %v1408 = vmax.f32 %v1324, 0.0
      %v1409 = vmax.f32 %v1326, 0.0
      %v1410 = vmax.f32 %v1330, 0.0
      %v1411 = vmax.f32 %v1332, 0.0
      %v1412 = vmax.f32 %v1334, 0.0
      %v1413 = vmax.f32 %v1336, 0.0
      %v1414 = vmax.f32 %v1340, 0.0
      %v1415 = vmax.f32 %v1342, 0.0
      %v1416 = vmax.f32 %v1344, 0.0
      %v1417 = vmax.f32 %v1346, 0.0
      %v1418 = vmax.f32 %v1350, 0.0
      %v1419 = vmax.f32 %v1352, 0.0
      %v1420 = vmax.f32 %v1354, 0.0
      %v1421 = vmax.f32 %v1356, 0.0
      %v1422 = vld [vmem:[%s4] sm:$0xff]
      %v1423 = vld [vmem:[%s4 + $0x8] sm:$0xff]
      %v1424 = vld [vmem:[%s4 + $0x10] sm:$0xff]
      %v1425 = vld [vmem:[%s4 + $0x18] sm:$0xff]
      %v1426 = vld [vmem:[%s4 + $0x20] sm:$0xff]
      %v1427 = vld [vmem:[%s4 + $0x28] sm:$0xff]
      %v1428 = vld [vmem:[%s4 + $0x30] sm:$0xff]
      %v1429 = vld [vmem:[%s4 + $0x38] sm:$0xff]
      %v1430 = vld [vmem:[%s4 + $0x40] sm:$0xff]
      %v1431 = vld [vmem:[%s4 + $0x48] sm:$0xff]
      %v1432 = vld [vmem:[%s4 + $0x50] sm:$0xff]
      %v1433 = vld [vmem:[%s4 + $0x58] sm:$0xff]
      %v1434 = vld [vmem:[%s4 + $0x60] sm:$0xff]
      %v1435 = vld [vmem:[%s4 + $0x68] sm:$0xff]
      %v1436 = vld [vmem:[%s4 + $0x70] sm:$0xff]
      %v1437 = vld [vmem:[%s4 + $0x78] sm:$0xff]
      %v1438 = vld [vmem:[%s4 + $0x80] sm:$0xff]
      %v1439 = vld [vmem:[%s4 + $0x88] sm:$0xff]
      %v1440 = vld [vmem:[%s4 + $0x90] sm:$0xff]
      %v1441 = vld [vmem:[%s4 + $0x98] sm:$0xff]
      %v1442 = vld [vmem:[%s4 + $0xa0] sm:$0xff]
      %v1443 = vld [vmem:[%s4 + $0xa8] sm:$0xff]
      %v1444 = vld [vmem:[%s4 + $0xb0] sm:$0xff]
      %v1445 = vld [vmem:[%s4 + $0xb8] sm:$0xff]
      %v1446 = vld [vmem:[%s4 + $0xc0] sm:$0xff]
      %v1447 = vld [vmem:[%s4 + $0xc8] sm:$0xff]
      %v1448 = vld [vmem:[%s4 + $0xd0] sm:$0xff]
      %v1449 = vld [vmem:[%s4 + $0xd8] sm:$0xff]
      %v1450 = vld [vmem:[%s4 + $0xe0] sm:$0xff]
      %v1451 = vld [vmem:[%s4 + $0xe8] sm:$0xff]
      %v1452 = vld [vmem:[%s4 + $0xf0] sm:$0xff]
      %v1453 = vld [vmem:[%s4 + $0xf8] sm:$0xff]
      %s1454 = sld [smem:[#allocation3]]
      %v1455 = vstv %s1454
      %1456 = vmatprep.subr.mxu0 0.0
      %1457 = vmatpush1.msra.mxu0 %v1437
      %1458 = vmatprep.subr.mxu0 0.0
      %1459 = vmatpush1.msra.mxu0 %v1436
      %1460 = vmatprep.subr.mxu0 0.0
      %1461 = vmatpush1.msra.mxu0 %v1435
      %1462 = vmatprep.subr.mxu0 0.0
      %1463 = vmatpush1.msra.mxu0 %v1434
      %1464 = vmatprep.subr.mxu0 0.0
      %1465 = vmatpush1.msra.mxu0 %v1433
      %1466 = vmatprep.subr.mxu0 0.0
      %1467 = vmatpush1.msra.mxu0 %v1432
      %1468 = vmatprep.subr.mxu0 0.0
      %1469 = vmatpush1.msra.mxu0 %v1431
      %1470 = vmatprep.subr.mxu0 0.0
      %1471 = vmatpush1.msra.mxu0 %v1430
      %1472 = vmatprep.subr.mxu0 0.0
      %1473 = vmatpush1.msra.mxu0 %v1429
      %1474 = vmatprep.subr.mxu0 0.0
      %1475 = vmatpush1.msra.mxu0 %v1428
      %1476 = vmatprep.subr.mxu0 0.0
      %1477 = vmatpush1.msra.mxu0 %v1427
      %1478 = vmatprep.subr.mxu0 0.0
      %1479 = vmatpush1.msra.mxu0 %v1426
      %1480 = vmatprep.subr.mxu0 0.0
      %1481 = vmatpush1.msra.mxu0 %v1425
      %1482 = vmatprep.subr.mxu0 0.0
      %1483 = vmatpush1.msra.mxu0 %v1424
      %1484 = vmatprep.subr.mxu0 0.0
      %1485 = vmatpush1.msra.mxu0 %v1423
      %1486 = vmatprep.subr.mxu0 0.0
      %1487 = vmatpush1.msra.mxu0 %v1422
      %1488 = vmatprep.subr.mxu0 0.0
      %1489 = vmatpush2.msra.mxu0 %v1453
      %1490 = vmatprep.subr.mxu0 0.0
      %1491 = vmatpush2.msra.mxu0 %v1452
      %1492 = vmatprep.subr.mxu0 0.0
      %1493 = vmatpush2.msra.mxu0 %v1451
      %1494 = vmatprep.subr.mxu0 0.0
      %1495 = vmatpush2.msra.mxu0 %v1450
      %1496 = vmatprep.subr.mxu0 0.0
      %1497 = vmatpush2.msra.mxu0 %v1449
      %1498 = vmatprep.subr.mxu0 0.0
      %1499 = vmatpush2.msra.mxu0 %v1448
      %1500 = vmatprep.subr.mxu0 0.0
      %1501 = vmatpush2.msra.mxu0 %v1447
      %1502 = vmatprep.subr.mxu0 0.0
      %1503 = vmatpush2.msra.mxu0 %v1446
      %1504 = vmatprep.subr.mxu0 0.0
      %1505 = vmatpush2.msra.mxu0 %v1445
      %1506 = vmatprep.subr.mxu0 0.0
      %1507 = vmatpush2.msra.mxu0 %v1444
      %1508 = vmatprep.subr.mxu0 0.0
      %1509 = vmatpush2.msra.mxu0 %v1443
      %1510 = vmatprep.subr.mxu0 0.0
      %1511 = vmatpush2.msra.mxu0 %v1442
      %1512 = vmatprep.subr.mxu0 0.0
      %1513 = vmatpush2.msra.mxu0 %v1441
      %1514 = vmatprep.subr.mxu0 0.0
      %1515 = vmatpush2.msra.mxu0 %v1440
      %1516 = vmatprep.subr.mxu0 0.0
      %1517 = vmatpush2.msra.mxu0 %v1439
      %1518 = vmatprep.subr.mxu0 0.0
      %1519 = vmatpush2.msra.mxu0 %v1438
      %1520 = vmatprep.mubr.f32.mxu0 %v1359
      %1521 = vmatmul.mubr.f32.gmra.mxu0 %v1358
      %v1522 = vpop.f32.mrf.mxu0
      %v1523 = vadd.f32 %v1455, %v1522
      %v1524 = vpop.f32.mrf.mxu0
      %1525 = vmatprep.mubr.f32.mxu0 %v1361
      %1526 = vmatmul.mubr.f32.gmra.mxu0 %v1360
      %v1527 = vpop.f32.mrf.mxu0
      %v1528 = vadd.f32 %v1455, %v1527
      %v1529 = vpop.f32.mrf.mxu0
      %1530 = vmatprep.mubr.f32.mxu0 %v1363
      %1531 = vmatmul.mubr.f32.gmra.mxu0 %v1362
      %v1532 = vpop.f32.mrf.mxu0
      %v1533 = vadd.f32 %v1455, %v1532
      %v1534 = vpop.f32.mrf.mxu0
      %1535 = vmatprep.mubr.f32.mxu0 %v1365
      %1536 = vmatmul.mubr.f32.gmra.mxu0 %v1364
      %v1537 = vpop.f32.mrf.mxu0
      %v1538 = vadd.f32 %v1455, %v1537
      %v1539 = vpop.f32.mrf.mxu0
      %1540 = vmatprep.mubr.f32.mxu0 %v1367
      %1541 = vmatmul.mubr.f32.gmra.mxu0 %v1366
      %v1542 = vpop.f32.mrf.mxu0
      %v1543 = vadd.f32 %v1455, %v1542
      %v1544 = vpop.f32.mrf.mxu0
      %1545 = vmatprep.mubr.f32.mxu0 %v1369
      %1546 = vmatmul.mubr.f32.gmra.mxu0 %v1368
      %v1547 = vpop.f32.mrf.mxu0
      %v1548 = vadd.f32 %v1455, %v1547
      %v1549 = vpop.f32.mrf.mxu0
      %1550 = vmatprep.mubr.f32.mxu0 %v1371
      %1551 = vmatmul.mubr.f32.gmra.mxu0 %v1370
      %v1552 = vpop.f32.mrf.mxu0
      %v1553 = vadd.f32 %v1455, %v1552
      %v1554 = vpop.f32.mrf.mxu0
      %1555 = vmatprep.mubr.f32.mxu0 %v1373
      %1556 = vmatmul.mubr.f32.gmra.mxu0 %v1372
      %v1557 = vpop.f32.mrf.mxu0
      %v1558 = vadd.f32 %v1455, %v1557
      %v1559 = vpop.f32.mrf.mxu0
      %1560 = vmatprep.mubr.f32.mxu0 %v1375
      %1561 = vmatmul.mubr.f32.gmra.mxu0 %v1374
      %v1562 = vpop.f32.mrf.mxu0
      %v1563 = vadd.f32 %v1455, %v1562
      %v1564 = vpop.f32.mrf.mxu0
      %1565 = vmatprep.mubr.f32.mxu0 %v1377
      %1566 = vmatmul.mubr.f32.gmra.mxu0 %v1376
      %v1567 = vpop.f32.mrf.mxu0
      %v1568 = vadd.f32 %v1455, %v1567
      %v1569 = vpop.f32.mrf.mxu0
      %1570 = vmatprep.mubr.f32.mxu0 %v1379
      %1571 = vmatmul.mubr.f32.gmra.mxu0 %v1378
      %v1572 = vpop.f32.mrf.mxu0
      %v1573 = vadd.f32 %v1455, %v1572
      %v1574 = vpop.f32.mrf.mxu0
      %1575 = vmatprep.mubr.f32.mxu0 %v1381
      %1576 = vmatmul.mubr.f32.gmra.mxu0 %v1380
      %v1577 = vpop.f32.mrf.mxu0
      %v1578 = vadd.f32 %v1455, %v1577
      %v1579 = vpop.f32.mrf.mxu0
      %1580 = vmatprep.mubr.f32.mxu0 %v1383
      %1581 = vmatmul.mubr.f32.gmra.mxu0 %v1382
      %v1582 = vpop.f32.mrf.mxu0
      %v1583 = vadd.f32 %v1455, %v1582
      %v1584 = vpop.f32.mrf.mxu0
      %1585 = vmatprep.mubr.f32.mxu0 %v1385
      %1586 = vmatmul.mubr.f32.gmra.mxu0 %v1384
      %v1587 = vpop.f32.mrf.mxu0
      %v1588 = vadd.f32 %v1455, %v1587
      %v1589 = vpop.f32.mrf.mxu0
      %1590 = vmatprep.mubr.f32.mxu0 %v1387
      %1591 = vmatmul.mubr.f32.gmra.mxu0 %v1386
      %v1592 = vpop.f32.mrf.mxu0
      %v1593 = vadd.f32 %v1455, %v1592
      %v1594 = vpop.f32.mrf.mxu0
      %1595 = vmatprep.mubr.f32.mxu0 %v1389
      %1596 = vmatmul.mubr.f32.gmra.mxu0 %v1388
      %v1597 = vpop.f32.mrf.mxu0
      %v1598 = vadd.f32 %v1455, %v1597
      %v1599 = vpop.f32.mrf.mxu0
      %1600 = vmatprep.mubr.f32.mxu0 %v1391
      %1601 = vmatmul.mubr.f32.gmra.mxu0 %v1390
      %v1602 = vpop.f32.mrf.mxu0
      %v1603 = vadd.f32 %v1455, %v1602
      %v1604 = vpop.f32.mrf.mxu0
      %1605 = vmatprep.mubr.f32.mxu0 %v1393
      %1606 = vmatmul.mubr.f32.gmra.mxu0 %v1392
      %v1607 = vpop.f32.mrf.mxu0
      %v1608 = vadd.f32 %v1455, %v1607
      %v1609 = vpop.f32.mrf.mxu0
      %1610 = vmatprep.mubr.f32.mxu0 %v1395
      %1611 = vmatmul.mubr.f32.gmra.mxu0 %v1394
      %v1612 = vpop.f32.mrf.mxu0
      %v1613 = vadd.f32 %v1455, %v1612
      %v1614 = vpop.f32.mrf.mxu0
      %1615 = vmatprep.mubr.f32.mxu0 %v1397
      %1616 = vmatmul.mubr.f32.gmra.mxu0 %v1396
      %v1617 = vpop.f32.mrf.mxu0
      %v1618 = vadd.f32 %v1455, %v1617
      %v1619 = vpop.f32.mrf.mxu0
      %1620 = vmatprep.mubr.f32.mxu0 %v1399
      %1621 = vmatmul.mubr.f32.gmra.mxu0 %v1398
      %v1622 = vpop.f32.mrf.mxu0
      %v1623 = vadd.f32 %v1455, %v1622
      %v1624 = vpop.f32.mrf.mxu0
      %1625 = vmatprep.mubr.f32.mxu0 %v1401
      %1626 = vmatmul.mubr.f32.gmra.mxu0 %v1400
      %v1627 = vpop.f32.mrf.mxu0
      %v1628 = vadd.f32 %v1455, %v1627
      %v1629 = vpop.f32.mrf.mxu0
      %1630 = vmatprep.mubr.f32.mxu0 %v1403
      %1631 = vmatmul.mubr.f32.gmra.mxu0 %v1402
      %v1632 = vpop.f32.mrf.mxu0
      %v1633 = vadd.f32 %v1455, %v1632
      %v1634 = vpop.f32.mrf.mxu0
      %1635 = vmatprep.mubr.f32.mxu0 %v1405
      %1636 = vmatmul.mubr.f32.gmra.mxu0 %v1404
      %v1637 = vpop.f32.mrf.mxu0
      %v1638 = vadd.f32 %v1455, %v1637
      %v1639 = vpop.f32.mrf.mxu0
      %1640 = vmatprep.mubr.f32.mxu0 %v1407
      %1641 = vmatmul.mubr.f32.gmra.mxu0 %v1406
      %v1642 = vpop.f32.mrf.mxu0
      %v1643 = vadd.f32 %v1455, %v1642
      %v1644 = vpop.f32.mrf.mxu0
      %1645 = vmatprep.mubr.f32.mxu0 %v1409
      %1646 = vmatmul.mubr.f32.gmra.mxu0 %v1408
      %v1647 = vpop.f32.mrf.mxu0
      %v1648 = vadd.f32 %v1455, %v1647
      %v1649 = vpop.f32.mrf.mxu0
      %1650 = vmatprep.mubr.f32.mxu0 %v1411
      %1651 = vmatmul.mubr.f32.gmra.mxu0 %v1410
      %v1652 = vpop.f32.mrf.mxu0
      %v1653 = vadd.f32 %v1455, %v1652
      %v1654 = vpop.f32.mrf.mxu0
      %1655 = vmatprep.mubr.f32.mxu0 %v1413
      %1656 = vmatmul.mubr.f32.gmra.mxu0 %v1412
      %v1657 = vpop.f32.mrf.mxu0
      %v1658 = vadd.f32 %v1455, %v1657
      %v1659 = vpop.f32.mrf.mxu0
      %1660 = vmatprep.mubr.f32.mxu0 %v1415
      %1661 = vmatmul.mubr.f32.gmra.mxu0 %v1414
      %v1662 = vpop.f32.mrf.mxu0
      %v1663 = vadd.f32 %v1455, %v1662
      %v1664 = vpop.f32.mrf.mxu0
      %1665 = vmatprep.mubr.f32.mxu0 %v1417
      %1666 = vmatmul.mubr.f32.gmra.mxu0 %v1416
      %v1667 = vpop.f32.mrf.mxu0
      %v1668 = vadd.f32 %v1455, %v1667
      %v1669 = vpop.f32.mrf.mxu0
      %1670 = vmatprep.mubr.f32.mxu0 %v1419
      %1671 = vmatmul.mubr.f32.gmra.mxu0 %v1418
      %v1672 = vpop.f32.mrf.mxu0
      %v1673 = vadd.f32 %v1455, %v1672
      %v1674 = vpop.f32.mrf.mxu0
      %1675 = vmatprep.mubr.f32.mxu0 %v1421
      %1676 = vmatmul.mubr.f32.gmra.mxu0 %v1420
      %v1677 = vpop.f32.mrf.mxu0
      %v1678 = vadd.f32 %v1455, %v1677
      %v1679 = vpop.f32.mrf.mxu0
      %1680 = vdwg.mxu0
      %vm1681 = vcmask 7168
      %1682 = vst.msk [vmem:[%s254] sm:$0xff] %vm1681, %v1523
      %1683 = vst.msk [vmem:[%s254 + $0x8] sm:$0xff] %vm1681, %v1528
      %1684 = vst.msk [vmem:[%s254 + $0x10] sm:$0xff] %vm1681, %v1533
      %1685 = vst.msk [vmem:[%s254 + $0x18] sm:$0xff] %vm1681, %v1538
      %1686 = vst.msk [vmem:[%s254 + $0x20] sm:$0xff] %vm1681, %v1543
      %1687 = vst.msk [vmem:[%s254 + $0x28] sm:$0xff] %vm1681, %v1548
      %1688 = vst.msk [vmem:[%s254 + $0x30] sm:$0xff] %vm1681, %v1553
      %1689 = vst.msk [vmem:[%s254 + $0x38] sm:$0xff] %vm1681, %v1558
      %1690 = vst.msk [vmem:[%s254 + $0x40] sm:$0xff] %vm1681, %v1563
      %1691 = vst.msk [vmem:[%s254 + $0x48] sm:$0xff] %vm1681, %v1568
      %1692 = vst.msk [vmem:[%s254 + $0x50] sm:$0xff] %vm1681, %v1573
      %1693 = vst.msk [vmem:[%s254 + $0x58] sm:$0xff] %vm1681, %v1578
      %1694 = vst.msk [vmem:[%s254 + $0x60] sm:$0xff] %vm1681, %v1583
      %1695 = vst.msk [vmem:[%s254 + $0x68] sm:$0xff] %vm1681, %v1588
      %1696 = vst.msk [vmem:[%s254 + $0x70] sm:$0xff] %vm1681, %v1593
      %1697 = vst.msk [vmem:[%s254 + $0x78] sm:$0xff] %vm1681, %v1598
      %1698 = vst.msk [vmem:[%s254 + $0x80] sm:$0xff] %vm1681, %v1603
      %1699 = vst.msk [vmem:[%s254 + $0x88] sm:$0xff] %vm1681, %v1608
      %1700 = vst.msk [vmem:[%s254 + $0x90] sm:$0xff] %vm1681, %v1613
      %1701 = vst.msk [vmem:[%s254 + $0x98] sm:$0xff] %vm1681, %v1618
      %1702 = vst.msk [vmem:[%s254 + $0xa0] sm:$0xff] %vm1681, %v1623
      %1703 = vst.msk [vmem:[%s254 + $0xa8] sm:$0xff] %vm1681, %v1628
      %1704 = vst.msk [vmem:[%s254 + $0xb0] sm:$0xff] %vm1681, %v1633
      %1705 = vst.msk [vmem:[%s254 + $0xb8] sm:$0xff] %vm1681, %v1638
      %1706 = vst.msk [vmem:[%s254 + $0xc0] sm:$0xff] %vm1681, %v1643
      %1707 = vst.msk [vmem:[%s254 + $0xc8] sm:$0xff] %vm1681, %v1648
      %1708 = vst.msk [vmem:[%s254 + $0xd0] sm:$0xff] %vm1681, %v1653
      %1709 = vst.msk [vmem:[%s254 + $0xd8] sm:$0xff] %vm1681, %v1658
      %1710 = vst.msk [vmem:[%s254 + $0xe0] sm:$0xff] %vm1681, %v1663
      %1711 = vst.msk [vmem:[%s254 + $0xe8] sm:$0xff] %vm1681, %v1668
      %1712 = vst.msk [vmem:[%s254 + $0xf0] sm:$0xff] %vm1681, %v1673
      %1713 = vst.msk [vmem:[%s254 + $0xf8] sm:$0xff] %vm1681, %v1678
      %s1714 = smul.u32 32, %s18
      %p1715 = scmp.lt.s32.totalorder %s1714, 63
      %s1716 = scalar_select %p1715, %s1714, 63
      %s1717 = smul.addr %s1716, 8
      %s1718 = scalar_lea.vmem %s6, %s1717
      // Predicated region
      $region45: #{critic_v_forward.1} parent=43 // pred_check
        %p1719 = pneg %p167
      $region46: #{critic_v_forward.1} parent=43 // pred_check_branch
        %1721 = sbr.rel (%p1719) target = $region48
      $region47: #{critic_v_forward.1} parent=43 // pred_region
        %s1722 = smul.u32 32, %s18
      $region48: #{critic_v_forward.1} parent=43 // pred_fallthru
        _
    $region44: #{critic_v_forward.1} parent=5 // pred_fallthru
      _
    %p1723 = scmp.le.s32.totalorder 2, %s13
    // Predicated region
    $region49: #{critic_v_forward.1} parent=5 // pred_check
      %p1724 = pneg %p1723
    $region50: #{critic_v_forward.1} parent=5 // pred_check_branch
      %1726 = sbr.rel (%p1724) target = $region52
    $region51: #{critic_v_forward.1} parent=5 // pred_region
      %s1727 = ssub.s32 %s13, 2
      // Predicated region
      $region53: #{critic_v_forward.1} parent=51 // pred_check
        %p1728 = pneg %p173
      $region54: #{critic_v_forward.1} parent=51 // pred_check_branch
        %1730 = sbr.rel (%p1728) target = $region56
      $region55: #{critic_v_forward.1} parent=51 // pred_region
        %s1731 = smul.u32 32, %s19
        %p1732 = scmp.lt.s32.totalorder %s1731, 63
        %s1733 = scalar_select %p1732, %s1731, 63
        %s1734 = smul.addr %s1733, 8
        %s1735 = scalar_lea.vmem %s6, %s1734
      $region56: #{critic_v_forward.1} parent=51 // pred_fallthru
        _
    $region52: #{critic_v_forward.1} parent=5 // pred_fallthru
      _
  $region6: #{critic_v_forward.1} parent=0 // loop_footer
    %s17 = sadd.s32 1, %s13
  $region7: #{critic_v_forward.1} parent=0 // loop_footer_branch
    %12 = sbr.rel target = $region3
  $region8: #{critic_v_forward.1} parent=0 // loop_exit
    _

</llo_original>
